<compile_context>
chip_gen: v6e
topology: v6e:2x2x1
jax: 0.10.0
libtpu: 0.0.40
codegen_flags: <defaults>
</compile_context>

<pallas_src>
import math

import jax
import jax.numpy as jnp
from jax import lax
from jax.experimental import pallas as pl
from jax.experimental.pallas import tpu as pltpu


# ---- Pallas kernel -----------------------------------------------------------
def _attn_agg_kernel(x_ref, idx_ref, wf_ref, bf_ref, w2_ref,
                     acc_out_ref, m_out_ref, l_out_ref,
                     acc_ref, m_ref, l_ref):
    step = pl.program_id(1)               # node-tile axis within this split

    @pl.when(step == 0)
    def _init():
        m_ref[...] = jnp.full_like(m_ref, -1e30)
        l_ref[...] = jnp.zeros_like(l_ref)
        acc_ref[...] = jnp.zeros_like(acc_ref)

    # Fused transform || gate-hidden projection (bf16 MXU push, f32 accumulate),
    # bias + ReLU in f32 (Dropout = identity in eval mode).
    x = x_ref[...]                                                       # [TN, C_in] bf16
    f = jnp.dot(x, wf_ref[...], preferred_element_type=jnp.float32)     # [TN, C_fused] f32
    f = jnp.maximum(f + bf_ref[...], 0.0)

    # Gate logit per node: VPU multiply + lane reduce.  w2 row is zero-padded
    # over the transform lanes (no lane slicing of f); Linear2's bias is a
    # constant per-node offset and cancels in the per-segment softmax.
    gate = jnp.sum(f * w2_ref[...], axis=1, keepdims=True)              # [TN, 1]

    # Segment membership: nodes on sublanes, (lane-padded) segments on lanes.
    tn = f.shape[0]
    nseg = m_ref.shape[1]
    seg_ids = lax.broadcasted_iota(jnp.int32, (tn, nseg), 1)            # [TN, B]
    maskf = (idx_ref[...] == seg_ids).astype(jnp.float32)               # [TN, B]

    # Masked per-segment max of the gate logits (additive mask, no select).
    scores = gate + (maskf - 1.0) * 1e30                                # [TN, B]
    m_old = m_ref[...]                                                  # [1, B]
    m_new = jnp.maximum(m_old, jnp.max(scores, axis=0, keepdims=True))  # [1, B]

    # Per-node exp: gather each node's segment max via a one-hot lane reduce,
    # exponentiate TN values (not TN*B), then re-mask.  The minimum() is a
    # safety clamp for padded (index = -1) nodes, a no-op for real nodes.
    m_node = jnp.sum(maskf * m_new, axis=1, keepdims=True)              # [TN, 1]
    exp_gate = jnp.exp(jnp.minimum(gate - m_node, 0.0))                 # [TN, 1]
    e = maskf * exp_gate                                                # [TN, B]

    alpha = jnp.exp(m_old - m_new)                                      # [1, B]
    l_ref[...] = alpha * l_ref[...] + jnp.sum(e, axis=0, keepdims=True)

    # Accumulate only the transform half: acc[c, b] += sum_i t[i, c] * e[i, b].
    c_out = acc_ref.shape[0]
    t = f[:, :c_out]                                                    # [TN, C_out]
    contrib = lax.dot_general(t, e, (((0,), (0,)), ((), ())),
                              preferred_element_type=jnp.float32)       # [C_out, B]
    acc_ref[...] = alpha * acc_ref[...] + contrib
    m_ref[...] = m_new

    @pl.when(step == pl.num_programs(1) - 1)
    def _finalize():
        # Un-normalized partials per node-split; merged + normalized outside.
        acc_out_ref[0] = acc_ref[...]
        m_out_ref[0] = m_ref[...]
        l_out_ref[0] = l_ref[...]


# ---- wrapper -----------------------------------------------------------------
def attentional_graph_aggregation(x, index, dim_size, params, *,
                                  tile_n=256, num_node_splits=2):
    """x: [N, C_in] f32, index: [N] int (graph id), -> [dim_size, C_out] f32."""
    n, c_in = x.shape
    c_out = params["wt"].shape[1]
    c_h = params["w1"].shape[1]
    c_fused = c_out + c_h

    # Lane-dense segment axis: pad dim_size up to a multiple of 128.  Extra
    # columns never match any node and are sliced off at the end.
    b_pad = pl.cdiv(max(dim_size, 1), 128) * 128

    # Fuse the two projections that read x: [transform | gate-hidden].
    # Streamed / MXU operands in bf16, biases and gate head row in f32.
    w_fused = jnp.concatenate([params["wt"], params["w1"]], axis=1).astype(jnp.bfloat16)
    b_fused = jnp.concatenate([params["bt"], params["b1"]], axis=1).astype(jnp.float32)
    w2_row = jnp.concatenate(
        [jnp.zeros((1, c_out), jnp.float32),
         params["w2"].T.astype(jnp.float32)], axis=1)                   # [1, C_fused]

    # Node axis: pad to num_node_splits * blocks_per_split * tile_n; padded
    # nodes get index = -1 so they match no segment and contribute nothing.
    blocks_per_split = pl.cdiv(n, num_node_splits * tile_n)
    n_pad = num_node_splits * blocks_per_split * tile_n
    x_p = jnp.pad(x, ((0, n_pad - n), (0, 0))).astype(jnp.bfloat16)
    idx_p = jnp.pad(index.astype(jnp.int32), (0, n_pad - n), constant_values=-1)
    idx_p = idx_p.reshape(n_pad, 1)

    node_block = lambda s, t: (s * blocks_per_split + t, 0)
    const2 = lambda s, t: (0, 0)
    split_out = lambda s, t: (s, 0, 0)

    acc_p, m_p, l_p = pl.pallas_call(
        _attn_agg_kernel,
        out_shape=(
            jax.ShapeDtypeStruct((num_node_splits, c_out, b_pad), jnp.float32),
            jax.ShapeDtypeStruct((num_node_splits, 1, b_pad), jnp.float32),
            jax.ShapeDtypeStruct((num_node_splits, 1, b_pad), jnp.float32),
        ),
        grid=(num_node_splits, blocks_per_split),
        in_specs=[
            pl.BlockSpec((tile_n, c_in), node_block),       # x tile (bf16, streamed)
            pl.BlockSpec((tile_n, 1), node_block),          # index tile
            pl.BlockSpec((c_in, c_fused), const2),          # fused W (VMEM-resident)
            pl.BlockSpec((1, c_fused), const2),             # fused bias
            pl.BlockSpec((1, c_fused), const2),             # gate head row (zero-padded)
        ],
        out_specs=(
            pl.BlockSpec((1, c_out, b_pad), split_out),     # per-split weighted sums
            pl.BlockSpec((1, 1, b_pad), split_out),         # per-split running max
            pl.BlockSpec((1, 1, b_pad), split_out),         # per-split softmax denom
        ),
        scratch_shapes=[
            pltpu.VMEM((c_out, b_pad), jnp.float32),        # weighted-sum accumulator
            pltpu.VMEM((1, b_pad), jnp.float32),            # running segment max
            pltpu.VMEM((1, b_pad), jnp.float32),            # running segment sum
        ],
        compiler_params=pltpu.CompilerParams(
            # split axis parallel (2nd TC on v7x); node-tile axis is a reduction
            dimension_semantics=("parallel", "arbitrary")),
    )(x_p, idx_p, w_fused, b_fused, w2_row)

    # Cross-split log-sum-exp merge (tiny: num_splits x b_pad), then normalize.
    m = m_p[:, 0, :]                                        # [S, B_pad]
    l = l_p[:, 0, :]                                        # [S, B_pad]
    m_tot = jnp.max(m, axis=0)                              # [B_pad]
    scale = jnp.exp(m - m_tot[None, :])                     # [S, B_pad]
    l_tot = jnp.sum(scale * l, axis=0)                      # [B_pad]
    acc_tot = jnp.sum(scale[:, None, :] * acc_p, axis=0)    # [C_out, B_pad]
    inv = 1.0 / jnp.where(l_tot > 0.0, l_tot, 1.0)          # empty segments -> 0 rows
    out = (acc_tot * inv[None, :]).T                        # [B_pad, C_out]
    return out[:dim_size]                                   # [dim_size, C_out]


# ---- pure-JAX reference (same math in f32, for verification) -----------------
def reference_forward(x, index, dim_size, p):
    h = jnp.maximum(x @ p["w1"] + p["b1"], 0.0)
    gate = (h @ p["w2"] + p["b2"])[:, 0]                    # [N]
    t = jnp.maximum(x @ p["wt"] + p["bt"], 0.0)             # [N, C_out]
    seg_max = jax.ops.segment_max(gate, index, num_segments=dim_size)
    seg_max = jnp.where(jnp.isfinite(seg_max), seg_max, 0.0)  # empty segments
    e = jnp.exp(gate - seg_max[index])
    denom = jax.ops.segment_sum(e, index, num_segments=dim_size)
    w = e / jnp.where(denom[index] > 0.0, denom[index], 1.0)
    return jax.ops.segment_sum(w[:, None] * t, index, num_segments=dim_size)


# ---- deterministic parameter init (weights pre-transposed: y = x @ W + b) ----
def init_params(key, c_in, c_out):
    c_h = c_in // 2
    ks = jax.random.split(key, 6)
    s1 = 1.0 / math.sqrt(c_in)
    s2 = 1.0 / math.sqrt(c_h)
    return {
        "w1": jax.random.normal(ks[0], (c_in, c_h), jnp.float32) * s1,    # gate_nn Linear1
        "b1": jax.random.normal(ks[1], (1, c_h), jnp.float32) * 0.01,
        "w2": jax.random.normal(ks[2], (c_h, 1), jnp.float32) * s2,       # gate_nn Linear2
        "b2": jax.random.normal(ks[3], (1, 1), jnp.float32) * 0.01,
        "wt": jax.random.normal(ks[4], (c_in, c_out), jnp.float32) * s1,  # transform_nn
        "bt": jax.random.normal(ks[5], (1, c_out), jnp.float32) * 0.01,
    }


if __name__ == "__main__":
    C_IN, C_OUT = 64, 32       # in_channels, out_channels
    N_NODES, N_GRAPHS = 37, 6  # nodes across the batch, dim_size

    root = jax.random.PRNGKey(0)
    k_x, k_i, k_p = jax.random.split(root, 3)
    x = jax.random.normal(k_x, (N_NODES, C_IN), jnp.float32)
    index = jnp.sort(jax.random.randint(k_i, (N_NODES,), 0, N_GRAPHS, dtype=jnp.int32))
    params = init_params(k_p, C_IN, C_OUT)

    out = attentional_graph_aggregation(x, index, N_GRAPHS, params)
    jax.block_until_ready(out)

    ref = reference_forward(x, index, N_GRAPHS, params)
    assert out.shape == (N_GRAPHS, C_OUT)
    # Tolerance accounts for bf16 streaming of x / fused W (MXU inputs); all
    # softmax and accumulation math remains f32.
    assert bool(jnp.allclose(out, ref, rtol=2e-2, atol=5e-3)), (
        f"mismatch: max abs err {float(jnp.max(jnp.abs(out - ref)))}")

    print("KERNEL_OK")
</pallas_src>

<mosaic_0001>
module attributes {stable_mosaic.version = 11 : i64} {
  func.func @_attn_agg_kernel(%arg0: i32, %arg1: i32, %arg2: memref<256x64xbf16, #tpu.memory_space<vmem>>, %arg3: memref<256x1xi32, #tpu.memory_space<vmem>>, %arg4: memref<64x64xbf16, #tpu.memory_space<vmem>>, %arg5: memref<1x64xf32, #tpu.memory_space<vmem>>, %arg6: memref<1x64xf32, #tpu.memory_space<vmem>>, %arg7: memref<1x32x128xf32, #tpu.memory_space<vmem>>, %arg8: memref<1x1x128xf32, #tpu.memory_space<vmem>>, %arg9: memref<1x1x128xf32, #tpu.memory_space<vmem>>, %arg10: memref<32x128xf32, #tpu.memory_space<vmem>>, %arg11: memref<1x128xf32, #tpu.memory_space<vmem>>, %arg12: memref<1x128xf32, #tpu.memory_space<vmem>>) attributes {dimension_semantics = [#tpu.dimension_semantics<parallel>, #tpu.dimension_semantics<arbitrary>], iteration_bounds = array<i64: 2, 1>, scalar_prefetch = 0 : i64, scratch_operands = 3 : i64, tpu.core_type = #tpu.core_type<tc>, window_params = [{transform_indices = @transform_0, window_bounds = array<i64: 256, 64>}, {transform_indices = @transform_1, window_bounds = array<i64: 256, 1>}, {pipeline_mode = #tpu.pipeline_mode<synchronous>, transform_indices = @transform_2, window_bounds = array<i64: 64, 64>}, {pipeline_mode = #tpu.pipeline_mode<synchronous>, transform_indices = @transform_3, window_bounds = array<i64: 1, 64>}, {pipeline_mode = #tpu.pipeline_mode<synchronous>, transform_indices = @transform_4, window_bounds = array<i64: 1, 64>}, {transform_indices = @transform_5, window_bounds = array<i64: 1, 32, 128>}, {transform_indices = @transform_6, window_bounds = array<i64: 1, 1, 128>}, {transform_indices = @transform_7, window_bounds = array<i64: 1, 1, 128>}]} {
    %c0_i32 = arith.constant 0 : i32
    %0 = arith.cmpi eq, %arg1, %c0_i32 : i32
    %1 = arith.extui %0 : i1 to i32
    %c0_i32_0 = arith.constant 0 : i32
    %2 = arith.cmpi ne, %1, %c0_i32_0 : i32
    scf.if %2 {
      %cst_33 = arith.constant -1.000000e+30 : f32
      %61 = vector.broadcast %cst_33 : f32 to vector<1x128xf32>
      %c0_34 = arith.constant 0 : index
      %c0_35 = arith.constant 0 : index
      %62 = vector.load %arg11[%c0_34, %c0_35] : memref<1x128xf32, #tpu.memory_space<vmem>>, vector<1x128xf32>
      tpu.vector_store %arg11[%c0_34, %c0_35], %61 {strides = array<i32>} : memref<1x128xf32, #tpu.memory_space<vmem>>, vector<1x128xf32>,
      %cst_36 = arith.constant 0.000000e+00 : f32
      %63 = vector.broadcast %cst_36 : f32 to vector<1x128xf32>
      %c0_37 = arith.constant 0 : index
      %c0_38 = arith.constant 0 : index
      %64 = vector.load %arg12[%c0_37, %c0_38] : memref<1x128xf32, #tpu.memory_space<vmem>>, vector<1x128xf32>
      tpu.vector_store %arg12[%c0_37, %c0_38], %63 {strides = array<i32>} : memref<1x128xf32, #tpu.memory_space<vmem>>, vector<1x128xf32>,
      %cst_39 = arith.constant 0.000000e+00 : f32
      %65 = vector.broadcast %cst_39 : f32 to vector<32x128xf32>
      %c0_40 = arith.constant 0 : index
      %c0_41 = arith.constant 0 : index
      %66 = vector.load %arg10[%c0_40, %c0_41] : memref<32x128xf32, #tpu.memory_space<vmem>>, vector<32x128xf32>
      tpu.vector_store %arg10[%c0_40, %c0_41], %65 {strides = array<i32>} : memref<32x128xf32, #tpu.memory_space<vmem>>, vector<32x128xf32>,
    } else {
    }
    %c0 = arith.constant 0 : index
    %c0_1 = arith.constant 0 : index
    %3 = vector.load %arg2[%c0, %c0_1] : memref<256x64xbf16, #tpu.memory_space<vmem>>, vector<256x64xbf16>
    %c0_2 = arith.constant 0 : index
    %c0_3 = arith.constant 0 : index
    %4 = vector.load %arg4[%c0_2, %c0_3] : memref<64x64xbf16, #tpu.memory_space<vmem>>, vector<64x64xbf16>
    %cst = arith.constant dense<0.000000e+00> : vector<256x64xf32>
    %5 = tpu.matmul %3, %4, %cst {dimension_numbers = #tpu.dot_dimension_numbers<[1], [0], [0], [1], [0, 0, 1, 1], [], []>} : vector<256x64xbf16>, vector<64x64xbf16>, vector<256x64xf32> -> vector<256x64xf32>
    %c0_4 = arith.constant 0 : index
    %c0_5 = arith.constant 0 : index
    %6 = vector.load %arg5[%c0_4, %c0_5] : memref<1x64xf32, #tpu.memory_space<vmem>>, vector<1x64xf32>
    %7 = vector.broadcast %6 : vector<1x64xf32> to vector<256x64xf32>
    %8 = arith.addf %5, %7 : vector<256x64xf32>
    %cst_6 = arith.constant 0.000000e+00 : f32
    %9 = vector.broadcast %cst_6 : f32 to vector<256x64xf32>
    %10 = arith.maximumf %8, %9 : vector<256x64xf32>
    %c0_7 = arith.constant 0 : index
    %c0_8 = arith.constant 0 : index
    %11 = vector.load %arg6[%c0_7, %c0_8] : memref<1x64xf32, #tpu.memory_space<vmem>>, vector<1x64xf32>
    %12 = vector.broadcast %11 : vector<1x64xf32> to vector<256x64xf32>
    %13 = arith.mulf %10, %12 : vector<256x64xf32>
    %cst_9 = arith.constant dense<0.000000e+00> : vector<256xf32>
    %14 = vector.multi_reduction <add>, %13, %cst_9 [1] : vector<256x64xf32> to vector<256xf32>
    %15 = vector.shape_cast %14 : vector<256xf32> to vector<256x1xf32>
    %16 = tpu.iota {dimensions = array<i32: 1>} : vector<256x128xi32>
    %c0_10 = arith.constant 0 : index
    %c0_11 = arith.constant 0 : index
    %17 = vector.load %arg3[%c0_10, %c0_11] : memref<256x1xi32, #tpu.memory_space<vmem>>, vector<256x1xi32>
    %18 = vector.broadcast %17 : vector<256x1xi32> to vector<256x128xi32>
    %19 = arith.cmpi eq, %18, %16 : vector<256x128xi32>
    %20 = arith.extui %19 : vector<256x128xi1> to vector<256x128xi32>
    %21 = arith.sitofp %20 : vector<256x128xi32> to vector<256x128xf32>
    %cst_12 = arith.constant 1.000000e+00 : f32
    %22 = vector.broadcast %cst_12 : f32 to vector<256x128xf32>
    %23 = arith.subf %21, %22 : vector<256x128xf32>
    %cst_13 = arith.constant 1.000000e+30 : f32
    %24 = vector.broadcast %cst_13 : f32 to vector<256x128xf32>
    %25 = arith.mulf %23, %24 : vector<256x128xf32>
    %26 = vector.broadcast %15 : vector<256x1xf32> to vector<256x128xf32>
    %27 = arith.addf %26, %25 : vector<256x128xf32>
    %c0_14 = arith.constant 0 : index
    %c0_15 = arith.constant 0 : index
    %28 = vector.load %arg11[%c0_14, %c0_15] : memref<1x128xf32, #tpu.memory_space<vmem>>, vector<1x128xf32>
    %cst_16 = arith.constant dense<0xFF800000> : vector<128xf32>
    %29 = vector.multi_reduction <maximumf>, %27, %cst_16 [0] : vector<256x128xf32> to vector<128xf32>
    %30 = vector.shape_cast %29 : vector<128xf32> to vector<1x128xf32>
    %31 = arith.maximumf %28, %30 : vector<1x128xf32>
    %32 = vector.broadcast %31 : vector<1x128xf32> to vector<256x128xf32>
    %33 = arith.mulf %21, %32 : vector<256x128xf32>
    %cst_17 = arith.constant dense<0.000000e+00> : vector<256xf32>
    %34 = vector.multi_reduction <add>, %33, %cst_17 [1] : vector<256x128xf32> to vector<256xf32>
    %35 = vector.shape_cast %34 : vector<256xf32> to vector<256x1xf32>
    %36 = arith.subf %15, %35 : vector<256x1xf32>
    %cst_18 = arith.constant 0.000000e+00 : f32
    %37 = vector.broadcast %cst_18 : f32 to vector<256x1xf32>
    %38 = arith.minimumf %36, %37 : vector<256x1xf32>
    %39 = math.exp %38 : vector<256x1xf32>
    %40 = vector.broadcast %39 : vector<256x1xf32> to vector<256x128xf32>
    %41 = arith.mulf %21, %40 : vector<256x128xf32>
    %42 = arith.subf %28, %31 : vector<1x128xf32>
    %43 = math.exp %42 : vector<1x128xf32>
    %c0_19 = arith.constant 0 : index
    %c0_20 = arith.constant 0 : index
    %44 = vector.load %arg12[%c0_19, %c0_20] : memref<1x128xf32, #tpu.memory_space<vmem>>, vector<1x128xf32>
    %45 = arith.mulf %43, %44 : vector<1x128xf32>
    %cst_21 = arith.constant dense<0.000000e+00> : vector<128xf32>
    %46 = vector.multi_reduction <add>, %41, %cst_21 [0] : vector<256x128xf32> to vector<128xf32>
    %47 = vector.shape_cast %46 : vector<128xf32> to vector<1x128xf32>
    %48 = arith.addf %45, %47 : vector<1x128xf32>
    %c0_22 = arith.constant 0 : index
    %c0_23 = arith.constant 0 : index
    %49 = vector.load %arg12[%c0_22, %c0_23] : memref<1x128xf32, #tpu.memory_space<vmem>>, vector<1x128xf32>
    tpu.vector_store %arg12[%c0_22, %c0_23], %48 {strides = array<i32>} : memref<1x128xf32, #tpu.memory_space<vmem>>, vector<1x128xf32>,
    %50 = vector.extract_strided_slice %10 {offsets = [0, 0], sizes = [256, 32], strides = [1, 1]} : vector<256x64xf32> to vector<256x32xf32>
    %cst_24 = arith.constant dense<0.000000e+00> : vector<32x128xf32>
    %51 = tpu.matmul %50, %41, %cst_24 {dimension_numbers = #tpu.dot_dimension_numbers<[0], [0], [1], [1], [0, 1, 1, 1], [], []>} : vector<256x32xf32>, vector<256x128xf32>, vector<32x128xf32> -> vector<32x128xf32>
    %c0_25 = arith.constant 0 : index
    %c0_26 = arith.constant 0 : index
    %52 = vector.load %arg10[%c0_25, %c0_26] : memref<32x128xf32, #tpu.memory_space<vmem>>, vector<32x128xf32>
    %53 = vector.broadcast %43 : vector<1x128xf32> to vector<32x128xf32>
    %54 = arith.mulf %53, %52 : vector<32x128xf32>
    %55 = arith.addf %54, %51 : vector<32x128xf32>
    %c0_27 = arith.constant 0 : index
    %c0_28 = arith.constant 0 : index
    %56 = vector.load %arg10[%c0_27, %c0_28] : memref<32x128xf32, #tpu.memory_space<vmem>>, vector<32x128xf32>
    tpu.vector_store %arg10[%c0_27, %c0_28], %55 {strides = array<i32>} : memref<32x128xf32, #tpu.memory_space<vmem>>, vector<32x128xf32>,
    %c0_29 = arith.constant 0 : index
    %c0_30 = arith.constant 0 : index
    %57 = vector.load %arg11[%c0_29, %c0_30] : memref<1x128xf32, #tpu.memory_space<vmem>>, vector<1x128xf32>
    tpu.vector_store %arg11[%c0_29, %c0_30], %31 {strides = array<i32>} : memref<1x128xf32, #tpu.memory_space<vmem>>, vector<1x128xf32>,
    %c0_i32_31 = arith.constant 0 : i32
    %58 = arith.cmpi eq, %arg1, %c0_i32_31 : i32
    %59 = arith.extui %58 : i1 to i32
    %c0_i32_32 = arith.constant 0 : i32
    %60 = arith.cmpi ne, %59, %c0_i32_32 : i32
    scf.if %60 {
      %c0_33 = arith.constant 0 : index
      %c0_34 = arith.constant 0 : index
      %61 = vector.load %arg10[%c0_33, %c0_34] : memref<32x128xf32, #tpu.memory_space<vmem>>, vector<32x128xf32>
      %c0_35 = arith.constant 0 : index
      %c0_36 = arith.constant 0 : index
      %c0_37 = arith.constant 0 : index
      %62 = vector.load %arg7[%c0_35, %c0_36, %c0_37] : memref<1x32x128xf32, #tpu.memory_space<vmem>>, vector<1x32x128xf32>
      %63 = vector.shape_cast %62 : vector<1x32x128xf32> to vector<32x128xf32>
      %64 = vector.shape_cast %61 : vector<32x128xf32> to vector<1x32x128xf32>
      tpu.vector_store %arg7[%c0_35, %c0_36, %c0_37], %64 {strides = array<i32>} : memref<1x32x128xf32, #tpu.memory_space<vmem>>, vector<1x32x128xf32>,
      %c0_38 = arith.constant 0 : index
      %c0_39 = arith.constant 0 : index
      %65 = vector.load %arg11[%c0_38, %c0_39] : memref<1x128xf32, #tpu.memory_space<vmem>>, vector<1x128xf32>
      %c0_40 = arith.constant 0 : index
      %c0_41 = arith.constant 0 : index
      %c0_42 = arith.constant 0 : index
      %66 = vector.load %arg8[%c0_40, %c0_41, %c0_42] : memref<1x1x128xf32, #tpu.memory_space<vmem>>, vector<1x1x128xf32>
      %67 = vector.shape_cast %66 : vector<1x1x128xf32> to vector<1x128xf32>
      %68 = vector.shape_cast %65 : vector<1x128xf32> to vector<1x1x128xf32>
      tpu.vector_store %arg8[%c0_40, %c0_41, %c0_42], %68 {strides = array<i32>} : memref<1x1x128xf32, #tpu.memory_space<vmem>>, vector<1x1x128xf32>,
      %c0_43 = arith.constant 0 : index
      %c0_44 = arith.constant 0 : index
      %69 = vector.load %arg12[%c0_43, %c0_44] : memref<1x128xf32, #tpu.memory_space<vmem>>, vector<1x128xf32>
      %c0_45 = arith.constant 0 : index
      %c0_46 = arith.constant 0 : index
      %c0_47 = arith.constant 0 : index
      %70 = vector.load %arg9[%c0_45, %c0_46, %c0_47] : memref<1x1x128xf32, #tpu.memory_space<vmem>>, vector<1x1x128xf32>
      %71 = vector.shape_cast %70 : vector<1x1x128xf32> to vector<1x128xf32>
      %72 = vector.shape_cast %69 : vector<1x128xf32> to vector<1x1x128xf32>
      tpu.vector_store %arg9[%c0_45, %c0_46, %c0_47], %72 {strides = array<i32>} : memref<1x1x128xf32, #tpu.memory_space<vmem>>, vector<1x1x128xf32>,
    } else {
    }
    return
  }
  func.func @transform_0(%arg0: i32, %arg1: i32) -> (i32, i32) {
    %c1_i32 = arith.constant 1 : i32
    %0 = arith.muli %arg0, %c1_i32 : i32
    %1 = arith.addi %0, %arg1 : i32
    %c0_i32 = arith.constant 0 : i32
    %c0_i32_0 = arith.constant 0 : i32
    return %1, %c0_i32 : i32, i32
  }
  func.func @transform_1(%arg0: i32, %arg1: i32) -> (i32, i32) {
    %c1_i32 = arith.constant 1 : i32
    %0 = arith.muli %arg0, %c1_i32 : i32
    %1 = arith.addi %0, %arg1 : i32
    %c0_i32 = arith.constant 0 : i32
    %c0_i32_0 = arith.constant 0 : i32
    return %1, %c0_i32 : i32, i32
  }
  func.func @transform_2(%arg0: i32, %arg1: i32) -> (i32, i32) {
    %c0_i32 = arith.constant 0 : i32
    %c0_i32_0 = arith.constant 0 : i32
    %c0_i32_1 = arith.constant 0 : i32
    return %c0_i32, %c0_i32_0 : i32, i32
  }
  func.func @transform_3(%arg0: i32, %arg1: i32) -> (i32, i32) {
    %c0_i32 = arith.constant 0 : i32
    %c0_i32_0 = arith.constant 0 : i32
    %c0_i32_1 = arith.constant 0 : i32
    return %c0_i32, %c0_i32_0 : i32, i32
  }
  func.func @transform_4(%arg0: i32, %arg1: i32) -> (i32, i32) {
    %c0_i32 = arith.constant 0 : i32
    %c0_i32_0 = arith.constant 0 : i32
    %c0_i32_1 = arith.constant 0 : i32
    return %c0_i32, %c0_i32_0 : i32, i32
  }
  func.func @transform_5(%arg0: i32, %arg1: i32) -> (i32, i32, i32) {
    %c0_i32 = arith.constant 0 : i32
    %c0_i32_0 = arith.constant 0 : i32
    %c0_i32_1 = arith.constant 0 : i32
    return %arg0, %c0_i32, %c0_i32_0 : i32, i32, i32
  }
  func.func @transform_6(%arg0: i32, %arg1: i32) -> (i32, i32, i32) {
    %c0_i32 = arith.constant 0 : i32
    %c0_i32_0 = arith.constant 0 : i32
    %c0_i32_1 = arith.constant 0 : i32
    return %arg0, %c0_i32, %c0_i32_0 : i32, i32, i32
  }
  func.func @transform_7(%arg0: i32, %arg1: i32) -> (i32, i32, i32) {
    %c0_i32 = arith.constant 0 : i32
    %c0_i32_0 = arith.constant 0 : i32
    %c0_i32_1 = arith.constant 0 : i32
    return %arg0, %c0_i32, %c0_i32_0 : i32, i32, i32
  }
}

</mosaic_0001>

<llo_original>
// kernel: tpu_custom_call.1
$region0: #{tpu_custom_call.1}
  #allocation0 [shape = 'u32[]', space=smem, size = 0x4, offset = 0x4, fixed_abs, tag = 'smem constant byte address 0x4 - core index']
  #allocation1 [shape = 'u32[144,128]{1,0:T(1,128)}', space=vmem, size = 0x12000, scoped, tag = 'internal scratch']
  #allocation2 [shape = 'f32[32,128]{1,0:T(8,128)}', space=vmem, size = 0x4000, scoped, tag = 'scratch operand']
  #allocation3 [shape = 'f32[1,128]{1,0:T(1,128)}', space=vmem, size = 0x200, scoped, tag = 'scratch operand']
  #allocation4 [shape = 'f32[1,128]{1,0:T(1,128)}', space=vmem, size = 0x200, scoped, tag = 'scratch operand']
  %s0 = inlined_call_operand.vmem [shape: bf16[512,64], index: 0, kind: input, shape index: {}]
  %s1 = inlined_call_operand.vmem [shape: s32[512,1], index: 1, kind: input, shape index: {}]
  %s2 = inlined_call_operand.vmem [shape: bf16[64,64], index: 2, kind: input, shape index: {}]
  %s3 = inlined_call_operand.vmem [shape: f32[1,64], index: 3, kind: input, shape index: {}]
  %s4 = inlined_call_operand.vmem [shape: f32[1,64], index: 4, kind: input, shape index: {}]
  %s5 = inlined_call_operand.hbm [shape: f32[2,32,128], index: 5, kind: output, shape index: {0}]
  %s6 = inlined_call_operand.hbm [shape: f32[2,1,128], index: 6, kind: output, shape index: {1}]
  %s7 = inlined_call_operand.hbm [shape: f32[2,1,128], index: 7, kind: output, shape index: {2}]
  %8 = xla_tuple %s5, %s6, %s7
  %s9 = sld [smem:[#allocation0]]
  $region77: #{tpu_custom_call.1} parent=0
    _
  %s11 = ssub.s32 1, %s9
  %s12 = scalar_select 0, %s11, %s9
  $region1: #{tpu_custom_call.1} parent=0
    #allocation5 [shape = 'u8[32768]{0}', space=vmem, size = 0x8000, scoped, tag = 'output window, operand 0']
    #allocation6 [shape = 's32[2]{0}', space=sflag, size = 0x8, scoped, tag = 'scoped memory for tpu_custom_call.1']
    #allocation7 [shape = 'u8[1024]{0}', space=vmem, size = 0x400, scoped, tag = 'output window, operand 1']
    #allocation8 [shape = 's32[2]{0}', space=sflag, size = 0x8, scoped, tag = 'scoped memory for tpu_custom_call.1']
    #allocation9 [shape = 'u8[1024]{0}', space=vmem, size = 0x400, scoped, tag = 'output window, operand 2']
    %13 = vsyncpa [#allocation6], 0
    %s14 = scalar_lea.sflag [#allocation6], 1
    %15 = vsyncpa %s14, 0
    %16 = vsyncpa [#allocation8], 0
    %s17 = scalar_lea.sflag [#allocation8], 1
    %18 = vsyncpa %s17, 0
    loop: start=0, step=1, limit=4
    $region2: #{tpu_custom_call.1} parent=1 // loop_pre_header
      _
    $region3: #{tpu_custom_call.1} parent=1 // loop_header
      %s20 = sphi 0, %s24
      %p21 = scmp.ge.s32.totalorder %s20, 4
      %s27 = sphi 0, %s39
      %s28 = sphi 0, %s35
      %s29 = sphi 0, %s27
      %s30 = sphi 0, %s28
      %s31 = sphi 0, %s29
      %s32 = sphi 0, %s30
      %s44 = sphi 0, %s46
      %s47 = sphi 0, %s44
      %s48 = sphi 0, %s47
      %s64 = sphi 0, %s48
      %s72 = sphi 0, %s74
      %s75 = sphi 0, %s72
      %s76 = sphi 0, %s75
      %s92 = sphi 0, %s76
      %s96 = sphi 0, %s96
      %s98 = sphi 0, %s96
      %s99 = sphi 0, %s98
      %s113 = sphi 0, %s99
      %s117 = sphi 0, %s117
      %s119 = sphi 0, %s117
      %s120 = sphi 0, %s119
      %s134 = sphi 0, %s120
      %s138 = sphi 0, %s138
      %s140 = sphi 0, %s138
      %s141 = sphi 0, %s140
      %s155 = sphi 0, %s141
      %s161 = sphi 0, %s163
      %s164 = sphi 0, %s161
      %s165 = sphi 0, %s164
      %s181 = sphi 0, %s165
      %s187 = sphi 0, %s189
      %s190 = sphi 0, %s187
      %s191 = sphi 0, %s190
      %s207 = sphi 0, %s191
      %s213 = sphi 0, %s215
      %s216 = sphi 0, %s213
      %s217 = sphi 0, %s216
      %s233 = sphi 0, %s217
    $region4: #{tpu_custom_call.1} parent=1 // loop_header_branch
      %23 = sbr.rel (%p21) target = $region8
    $region5: #{tpu_custom_call.1} parent=1 // loop_body
      %s25 = ssub.s32 %s20, 1
      %s26 = ssub.s32 %s20, 2
      %s33 = sadd.s32 1, %s28
      %p34 = scmp.ge.s32.totalorder %s33, 1
      %s35 = scalar_select %p34, 0, %s33
      %s36 = sadd.s32 1, %s27
      %s37 = scalar_select %p34, %s36, %s27
      %p38 = scmp.ge.s32.totalorder %s37, 2
      %s39 = scalar_select %p38, 0, %s37
      %s40 = sadd.s32 %s27, %s28
      %s41 = sadd.s32 %s39, %s35
      %s42 = ssub.s32 %s40, %s41
      %p43 = scmp.eq.s32.totalorder %s42, 0
      %s45 = sadd.s32 %s44, 1
      %s46 = scalar_select %p43, %s44, %s45
      %p49 = pneg %p43
      %p50 = scmp.eq.s32.totalorder %s20, 1
      %p51 = por %p49, %p50
      %p52 = scmp.ne.s32.totalorder %s44, %s47
      %p53 = scmp.eq.s32.totalorder %s20, 0
      %p54 = por %p52, %p53
      %p55 = scmp.ne.s32.totalorder %s44, %s47
      %p56 = scmp.eq.s32.totalorder %s25, 1
      %p57 = por %p55, %p56
      %p58 = scmp.ne.s32.totalorder %s47, %s48
      %p59 = scmp.eq.s32.totalorder %s25, 0
      %p60 = por %p58, %p59
      %p61 = scmp.ne.s32.totalorder %s47, %s48
      %p62 = scmp.eq.s32.totalorder %s26, 1
      %p63 = por %p61, %p62
      %p65 = scmp.ne.s32.totalorder %s48, %s64
      %p66 = scmp.eq.s32.totalorder %s26, 0
      %p67 = por %p65, %p66
      %s68 = sadd.s32 %s27, %s28
      %s69 = sadd.s32 %s39, %s35
      %s70 = ssub.s32 %s68, %s69
      %p71 = scmp.eq.s32.totalorder %s70, 0
      %s73 = sadd.s32 %s72, 1
      %s74 = scalar_select %p71, %s72, %s73
      %p77 = pneg %p71
      %p78 = scmp.eq.s32.totalorder %s20, 1
      %p79 = por %p77, %p78
      %p80 = scmp.ne.s32.totalorder %s72, %s75
      %p81 = scmp.eq.s32.totalorder %s20, 0
      %p82 = por %p80, %p81
      %p83 = scmp.ne.s32.totalorder %s72, %s75
      %p84 = scmp.eq.s32.totalorder %s25, 1
      %p85 = por %p83, %p84
      %p86 = scmp.ne.s32.totalorder %s75, %s76
      %p87 = scmp.eq.s32.totalorder %s25, 0
      %p88 = por %p86, %p87
      %p89 = scmp.ne.s32.totalorder %s75, %s76
      %p90 = scmp.eq.s32.totalorder %s26, 1
      %p91 = por %p89, %p90
      %p93 = scmp.ne.s32.totalorder %s76, %s92
      %p94 = scmp.eq.s32.totalorder %s26, 0
      %p95 = por %p93, %p94
      %s97 = sadd.s32 %s96, 1
      %p100 = scmp.eq.s32.totalorder %s20, 1
      %p101 = scmp.ne.s32.totalorder %s96, %s98
      %p102 = scmp.eq.s32.totalorder %s20, 0
      %p103 = por %p101, %p102
      %p104 = scmp.ne.s32.totalorder %s96, %s98
      %p105 = scmp.eq.s32.totalorder %s25, 1
      %p106 = por %p104, %p105
      %p107 = scmp.ne.s32.totalorder %s98, %s99
      %p108 = scmp.eq.s32.totalorder %s25, 0
      %p109 = por %p107, %p108
      %p110 = scmp.ne.s32.totalorder %s98, %s99
      %p111 = scmp.eq.s32.totalorder %s26, 1
      %p112 = por %p110, %p111
      %p114 = scmp.ne.s32.totalorder %s99, %s113
      %p115 = scmp.eq.s32.totalorder %s26, 0
      %p116 = por %p114, %p115
      %s118 = sadd.s32 %s117, 1
      %p121 = scmp.eq.s32.totalorder %s20, 1
      %p122 = scmp.ne.s32.totalorder %s117, %s119
      %p123 = scmp.eq.s32.totalorder %s20, 0
      %p124 = por %p122, %p123
      %p125 = scmp.ne.s32.totalorder %s117, %s119
      %p126 = scmp.eq.s32.totalorder %s25, 1
      %p127 = por %p125, %p126
      %p128 = scmp.ne.s32.totalorder %s119, %s120
      %p129 = scmp.eq.s32.totalorder %s25, 0
      %p130 = por %p128, %p129
      %p131 = scmp.ne.s32.totalorder %s119, %s120
      %p132 = scmp.eq.s32.totalorder %s26, 1
      %p133 = por %p131, %p132
      %p135 = scmp.ne.s32.totalorder %s120, %s134
      %p136 = scmp.eq.s32.totalorder %s26, 0
      %p137 = por %p135, %p136
      %s139 = sadd.s32 %s138, 1
      %p142 = scmp.eq.s32.totalorder %s20, 1
      %p143 = scmp.ne.s32.totalorder %s138, %s140
      %p144 = scmp.eq.s32.totalorder %s20, 0
      %p145 = por %p143, %p144
      %p146 = scmp.ne.s32.totalorder %s138, %s140
      %p147 = scmp.eq.s32.totalorder %s25, 1
      %p148 = por %p146, %p147
      %p149 = scmp.ne.s32.totalorder %s140, %s141
      %p150 = scmp.eq.s32.totalorder %s25, 0
      %p151 = por %p149, %p150
      %p152 = scmp.ne.s32.totalorder %s140, %s141
      %p153 = scmp.eq.s32.totalorder %s26, 1
      %p154 = por %p152, %p153
      %p156 = scmp.ne.s32.totalorder %s141, %s155
      %p157 = scmp.eq.s32.totalorder %s26, 0
      %p158 = por %p156, %p157
      %s159 = ssub.s32 %s27, %s39
      %p160 = scmp.eq.s32.totalorder %s159, 0
      %s162 = sadd.s32 %s161, 1
      %s163 = scalar_select %p160, %s161, %s162
      %p166 = pneg %p160
      %p167 = scmp.eq.s32.totalorder %s20, 1
      %p168 = por %p166, %p167
      %p169 = scmp.ne.s32.totalorder %s161, %s164
      %p170 = scmp.eq.s32.totalorder %s20, 0
      %p171 = por %p169, %p170
      %p172 = scmp.ne.s32.totalorder %s161, %s164
      %p173 = scmp.eq.s32.totalorder %s25, 1
      %p174 = por %p172, %p173
      %p175 = scmp.ne.s32.totalorder %s164, %s165
      %p176 = scmp.eq.s32.totalorder %s25, 0
      %p177 = por %p175, %p176
      %p178 = scmp.ne.s32.totalorder %s164, %s165
      %p179 = scmp.eq.s32.totalorder %s26, 1
      %p180 = por %p178, %p179
      %p182 = scmp.ne.s32.totalorder %s165, %s181
      %p183 = scmp.eq.s32.totalorder %s26, 0
      %p184 = por %p182, %p183
      %s185 = ssub.s32 %s27, %s39
      %p186 = scmp.eq.s32.totalorder %s185, 0
      %s188 = sadd.s32 %s187, 1
      %s189 = scalar_select %p186, %s187, %s188
      %p192 = pneg %p186
      %p193 = scmp.eq.s32.totalorder %s20, 1
      %p194 = por %p192, %p193
      %p195 = scmp.ne.s32.totalorder %s187, %s190
      %p196 = scmp.eq.s32.totalorder %s20, 0
      %p197 = por %p195, %p196
      %p198 = scmp.ne.s32.totalorder %s187, %s190
      %p199 = scmp.eq.s32.totalorder %s25, 1
      %p200 = por %p198, %p199
      %p201 = scmp.ne.s32.totalorder %s190, %s191
      %p202 = scmp.eq.s32.totalorder %s25, 0
      %p203 = por %p201, %p202
      %p204 = scmp.ne.s32.totalorder %s190, %s191
      %p205 = scmp.eq.s32.totalorder %s26, 1
      %p206 = por %p204, %p205
      %p208 = scmp.ne.s32.totalorder %s191, %s207
      %p209 = scmp.eq.s32.totalorder %s26, 0
      %p210 = por %p208, %p209
      %s211 = ssub.s32 %s27, %s39
      %p212 = scmp.eq.s32.totalorder %s211, 0
      %s214 = sadd.s32 %s213, 1
      %s215 = scalar_select %p212, %s213, %s214
      %p218 = pneg %p212
      %p219 = scmp.eq.s32.totalorder %s20, 1
      %p220 = por %p218, %p219
      %p221 = scmp.ne.s32.totalorder %s213, %s216
      %p222 = scmp.eq.s32.totalorder %s20, 0
      %p223 = por %p221, %p222
      %p224 = scmp.ne.s32.totalorder %s213, %s216
      %p225 = scmp.eq.s32.totalorder %s25, 1
      %p226 = por %p224, %p225
      %p227 = scmp.ne.s32.totalorder %s216, %s217
      %p228 = scmp.eq.s32.totalorder %s25, 0
      %p229 = por %p227, %p228
      %p230 = scmp.ne.s32.totalorder %s216, %s217
      %p231 = scmp.eq.s32.totalorder %s26, 1
      %p232 = por %p230, %p231
      %p234 = scmp.ne.s32.totalorder %s217, %s233
      %p235 = scmp.eq.s32.totalorder %s26, 0
      %p236 = por %p234, %p235
      %p237 = scmp.le.s32.totalorder 1, %s20
      %p238 = scmp.lt.s32.totalorder %s20, 3
      %p239 = pnand %p237, %p238
      %p240 = pneg %p239
      // Predicated region
      $region9: #{tpu_custom_call.1} parent=5 // pred_check
        _
      $region10: #{tpu_custom_call.1} parent=5 // pred_check_branch
        %242 = sbr.rel (%p239) target = $region12
      $region11: #{tpu_custom_call.1} parent=5 // pred_region
        %s243 = ssub.s32 %s20, 1
        // Predicated region
        $region13: #{tpu_custom_call.1} parent=11 // pred_check
          %p244 = pneg %p109
        $region14: #{tpu_custom_call.1} parent=11 // pred_check_branch
          %246 = sbr.rel (%p244) target = $region16
        $region15: #{tpu_custom_call.1} parent=11 // pred_region
          _
        $region16: #{tpu_custom_call.1} parent=11 // pred_fallthru
          _
        // Predicated region
        $region17: #{tpu_custom_call.1} parent=11 // pred_check
          %p247 = pneg %p130
        $region18: #{tpu_custom_call.1} parent=11 // pred_check_branch
          %249 = sbr.rel (%p247) target = $region20
        $region19: #{tpu_custom_call.1} parent=11 // pred_region
          _
        $region20: #{tpu_custom_call.1} parent=11 // pred_fallthru
          _
        // Predicated region
        $region21: #{tpu_custom_call.1} parent=11 // pred_check
          %p250 = pneg %p151
        $region22: #{tpu_custom_call.1} parent=11 // pred_check_branch
          %252 = sbr.rel (%p250) target = $region24
        $region23: #{tpu_custom_call.1} parent=11 // pred_region
          _
        $region24: #{tpu_custom_call.1} parent=11 // pred_fallthru
          _
      $region12: #{tpu_custom_call.1} parent=5 // pred_fallthru
        _
      %p253 = scmp.lt.s32.totalorder %s20, 2
      // Predicated region
      $region25: #{tpu_custom_call.1} parent=5 // pred_check
        %p254 = pneg %p253
      $region26: #{tpu_custom_call.1} parent=5 // pred_check_branch
        %256 = sbr.rel (%p254) target = $region28
      $region27: #{tpu_custom_call.1} parent=5 // pred_region
        // Predicated region
        $region29: #{tpu_custom_call.1} parent=27 // pred_check
          %p257 = pneg %p54
        $region30: #{tpu_custom_call.1} parent=27 // pred_check_branch
          %259 = sbr.rel (%p257) target = $region32
        $region31: #{tpu_custom_call.1} parent=27 // pred_region
          %s260 = sadd.s32 %s27, %s28
          %s261 = smul.u32 32, %s260
          %p262 = scmp.lt.s32.totalorder %s261, 63
          %s263 = scalar_select %p262, %s261, 63
          %s264 = smul.addr %s263, 4
          %s265 = scalar_lea.vmem %s0, %s264
          %s266 = sadd.s32 %s27, %s28
          %s267 = smul.u32 32, %s266
        $region32: #{tpu_custom_call.1} parent=27 // pred_fallthru
          _
        // Predicated region
        $region33: #{tpu_custom_call.1} parent=27 // pred_check
          %p268 = pneg %p82
        $region34: #{tpu_custom_call.1} parent=27 // pred_check_branch
          %270 = sbr.rel (%p268) target = $region36
        $region35: #{tpu_custom_call.1} parent=27 // pred_region
          %s271 = sadd.s32 %s27, %s28
          %s272 = smul.u32 32, %s271
          %p273 = scmp.lt.s32.totalorder %s272, 63
          %s274 = scalar_select %p273, %s272, 63
          %s275 = smul.addr %s274, 8
          %s276 = scalar_lea.vmem %s1, %s275
          %s277 = sadd.s32 %s27, %s28
          %s278 = smul.u32 32, %s277
        $region36: #{tpu_custom_call.1} parent=27 // pred_fallthru
          _
      $region28: #{tpu_custom_call.1} parent=5 // pred_fallthru
        _
      %p279 = scmp.le.s32.totalorder 1, %s20
      %p280 = scmp.lt.s32.totalorder %s20, 3
      %p281 = pnand %p279, %p280
      %p282 = pneg %p281
      // Predicated region
      $region37: #{tpu_custom_call.1} parent=5 // pred_check
        _
      $region38: #{tpu_custom_call.1} parent=5 // pred_check_branch
        %284 = sbr.rel (%p281) target = $region40
      $region39: #{tpu_custom_call.1} parent=5 // pred_region
        %s285 = ssub.s32 %s20, 1
        %s286 = sadd.s32 %s29, %s30
        %s287 = smul.u32 32, %s286
        %p288 = scmp.lt.s32.totalorder %s287, 63
        %s289 = scalar_select %p288, %s287, 63
        %s290 = smul.addr %s289, 4
        %s291 = scalar_lea.vmem %s0, %s290
        %p292 = pneg %p60
        %p293 = pneg %p57
        %s294 = sadd.s32 %s29, %s30
        %s295 = smul.u32 32, %s294
        %p296 = scmp.lt.s32.totalorder %s295, 63
        %s297 = scalar_select %p296, %s295, 63
        %s298 = smul.addr %s297, 8
        %s299 = scalar_lea.vmem %s1, %s298
        %p300 = pneg %p88
        %p301 = pneg %p85
        %p302 = pneg %p109
        %p303 = pneg %p106
        %p304 = pneg %p130
        %p305 = pneg %p127
        %p306 = pneg %p151
        %p307 = pneg %p148
        %p308 = pneg %p177
        %p309 = pneg %p174
        %s310 = sand.u32 %s164, 1
        %s311 = scalar_lea.sflag [#allocation6], %s310
        %s312 = sand.u32 %s164, 1
        %s313 = smul.addr %s312, 32
        %s314 = scalar_lea.vmem [#allocation5], %s313
        %p315 = pneg %p203
        %p316 = pneg %p200
        %s317 = sand.u32 %s25, 1
        %s318 = scalar_lea.sflag [#allocation8], %s317
        %s319 = sand.u32 %s190, 1
        %s320 = scalar_lea.vmem [#allocation7], %s319
        %p321 = pneg %p229
        %p322 = pneg %p226
        %s323 = sand.u32 %s25, 1
        %s324 = scalar_lea.sflag [#allocation8], %s323
        %s325 = sand.u32 %s216, 1
        %s326 = scalar_lea.vmem [#allocation9], %s325
        %s327 = sadd.s32 %s29, %s30
        %s328 = smul.u32 32, %s327
        %p329 = scmp.lt.s32.totalorder %s328, 63
        %s330 = scalar_select %p329, %s328, 63
        %s331 = smul.addr %s330, 4
        %s332 = scalar_lea.vmem %s0, %s331
        %s333 = sadd.s32 %s29, %s30
        %s334 = smul.u32 32, %s333
        %s335 = sadd.s32 %s29, %s30
        %s336 = smul.u32 32, %s335
        %p337 = scmp.lt.s32.totalorder %s336, 63
        %s338 = scalar_select %p337, %s336, 63
        %s339 = smul.addr %s338, 8
        %s340 = scalar_lea.vmem %s1, %s339
        %s341 = sadd.s32 %s29, %s30
        %s342 = smul.u32 32, %s341
        %p344 = scmp.eq.s32.totalorder %s30, 0
        // Predicated region
        $region41: #{tpu_custom_call.1} parent=39 // pred_check
          %p345 = pneg %p344
        $region42: #{tpu_custom_call.1} parent=39 // pred_check_branch
          %347 = sbr.rel (%p345) target = $region44
        $region43: #{tpu_custom_call.1} parent=39 // pred_region
          %348 = vst [vmem:[#allocation3] sm:$0x1] -1e+30
          %349 = vst [vmem:[#allocation4] sm:$0x1] 0.0
          %350 = vst [vmem:[#allocation2] sm:$0xff] 0.0
          %351 = vst [vmem:[#allocation2 + $0x8] sm:$0xff] 0.0
          %352 = vst [vmem:[#allocation2 + $0x10] sm:$0xff] 0.0
          %353 = vst [vmem:[#allocation2 + $0x18] sm:$0xff] 0.0
        $region44: #{tpu_custom_call.1} parent=39 // pred_fallthru
          _
        %v354 = vld [vmem:[%s332] sm:$0xf]
        %v355 = vld [vmem:[%s332 + $0x4] sm:$0xf]
        %v356 = vld [vmem:[%s332 + $0x8] sm:$0xf]
        %v357 = vld [vmem:[%s332 + $0xc] sm:$0xf]
        %v358 = vld [vmem:[%s332 + $0x10] sm:$0xf]
        %v359 = vld [vmem:[%s332 + $0x14] sm:$0xf]
        %v360 = vld [vmem:[%s332 + $0x18] sm:$0xf]
        %v361 = vld [vmem:[%s332 + $0x1c] sm:$0xf]
        %v362 = vld [vmem:[%s332 + $0x20] sm:$0xf]
        %v363 = vld [vmem:[%s332 + $0x24] sm:$0xf]
        %v364 = vld [vmem:[%s332 + $0x28] sm:$0xf]
        %v365 = vld [vmem:[%s332 + $0x2c] sm:$0xf]
        %v366 = vld [vmem:[%s332 + $0x30] sm:$0xf]
        %v367 = vld [vmem:[%s332 + $0x34] sm:$0xf]
        %v368 = vld [vmem:[%s332 + $0x38] sm:$0xf]
        %v369 = vld [vmem:[%s332 + $0x3c] sm:$0xf]
        %v370 = vld [vmem:[%s332 + $0x40] sm:$0xf]
        %v371 = vld [vmem:[%s332 + $0x44] sm:$0xf]
        %v372 = vld [vmem:[%s332 + $0x48] sm:$0xf]
        %v373 = vld [vmem:[%s332 + $0x4c] sm:$0xf]
        %v374 = vld [vmem:[%s332 + $0x50] sm:$0xf]
        %v375 = vld [vmem:[%s332 + $0x54] sm:$0xf]
        %v376 = vld [vmem:[%s332 + $0x58] sm:$0xf]
        %v377 = vld [vmem:[%s332 + $0x5c] sm:$0xf]
        %v378 = vld [vmem:[%s332 + $0x60] sm:$0xf]
        %v379 = vld [vmem:[%s332 + $0x64] sm:$0xf]
        %v380 = vld [vmem:[%s332 + $0x68] sm:$0xf]
        %v381 = vld [vmem:[%s332 + $0x6c] sm:$0xf]
        %v382 = vld [vmem:[%s332 + $0x70] sm:$0xf]
        %v383 = vld [vmem:[%s332 + $0x74] sm:$0xf]
        %v384 = vld [vmem:[%s332 + $0x78] sm:$0xf]
        %v385 = vld [vmem:[%s332 + $0x7c] sm:$0xf]
        %v386 = vld [vmem:[%s2] sm:$0xf]
        %v387 = vld [vmem:[%s2 + $0x4] sm:$0xf]
        %v388 = vld [vmem:[%s2 + $0x8] sm:$0xf]
        %v389 = vld [vmem:[%s2 + $0xc] sm:$0xf]
        %v390 = vld [vmem:[%s2 + $0x10] sm:$0xf]
        %v391 = vld [vmem:[%s2 + $0x14] sm:$0xf]
        %v392 = vld [vmem:[%s2 + $0x18] sm:$0xf]
        %v393 = vld [vmem:[%s2 + $0x1c] sm:$0xf]
        %v394 = vld [vmem:[%s3] sm:$0x1]
        %v396 = vlaneseq
        %v397 = vshrl.u32 %v396, 7
        %v398 = vsub.s32 0, %v397
        %v399 = vrot.slane %v394, %v398
        %v433 = vunpack.c.l.b16 %v354
        %v434 = vunpack.c.l.b16 %v355
        %v435 = vunpack.c.l.b16 %v356
        %v436 = vunpack.c.l.b16 %v357
        %v437 = vunpack.c.l.b16 %v358
        %v438 = vunpack.c.l.b16 %v359
        %v439 = vunpack.c.l.b16 %v360
        %v440 = vunpack.c.l.b16 %v361
        %v441 = vunpack.c.l.b16 %v362
        %v442 = vunpack.c.l.b16 %v363
        %v443 = vunpack.c.l.b16 %v364
        %v444 = vunpack.c.l.b16 %v365
        %v445 = vunpack.c.l.b16 %v366
        %v446 = vunpack.c.l.b16 %v367
        %v447 = vunpack.c.l.b16 %v368
        %v448 = vunpack.c.l.b16 %v369
        %v449 = vunpack.c.l.b16 %v370
        %v450 = vunpack.c.l.b16 %v371
        %v451 = vunpack.c.l.b16 %v372
        %v452 = vunpack.c.l.b16 %v373
        %v453 = vunpack.c.l.b16 %v374
        %v454 = vunpack.c.l.b16 %v375
        %v455 = vunpack.c.l.b16 %v376
        %v456 = vunpack.c.l.b16 %v377
        %v457 = vunpack.c.l.b16 %v378
        %v458 = vunpack.c.l.b16 %v379
        %v459 = vunpack.c.l.b16 %v380
        %v460 = vunpack.c.l.b16 %v381
        %v461 = vunpack.c.l.b16 %v382
        %v462 = vunpack.c.l.b16 %v383
        %v463 = vunpack.c.l.b16 %v384
        %v464 = vunpack.c.l.b16 %v385
        %v465 = vpack.c.b16 %v434, %v433
        %v466 = vpack.c.b16 %v436, %v435
        %v467 = vpack.c.b16 %v438, %v437
        %v468 = vpack.c.b16 %v440, %v439
        %v469 = vpack.c.b16 %v442, %v441
        %v470 = vpack.c.b16 %v444, %v443
        %v471 = vpack.c.b16 %v446, %v445
        %v472 = vpack.c.b16 %v448, %v447
        %v473 = vpack.c.b16 %v450, %v449
        %v474 = vpack.c.b16 %v452, %v451
        %v475 = vpack.c.b16 %v454, %v453
        %v476 = vpack.c.b16 %v456, %v455
        %v477 = vpack.c.b16 %v458, %v457
        %v478 = vpack.c.b16 %v460, %v459
        %v479 = vpack.c.b16 %v462, %v461
        %v480 = vpack.c.b16 %v464, %v463
        %v489 = vunpack.c.l.b16 %v386
        %v490 = vunpack.c.l.b16 %v387
        %v491 = vunpack.c.l.b16 %v388
        %v492 = vunpack.c.l.b16 %v389
        %v493 = vunpack.c.l.b16 %v390
        %v494 = vunpack.c.l.b16 %v391
        %v495 = vunpack.c.l.b16 %v392
        %v496 = vunpack.c.l.b16 %v393
        %v497 = vpack.c.b16 %v490, %v489
        %v498 = vpack.c.b16 %v492, %v491
        %v499 = vpack.c.b16 %v494, %v493
        %v500 = vpack.c.b16 %v496, %v495
        %vm505 = vcmask 523264
        %v507 = vsel %vm505, %v465, 0
        %v510 = vsel %vm505, %v466, 0
        %v513 = vsel %vm505, %v467, 0
        %v516 = vsel %vm505, %v468, 0
        %v519 = vsel %vm505, %v469, 0
        %v522 = vsel %vm505, %v470, 0
        %v525 = vsel %vm505, %v471, 0
        %v528 = vsel %vm505, %v472, 0
        %v531 = vsel %vm505, %v473, 0
        %v534 = vsel %vm505, %v474, 0
        %v537 = vsel %vm505, %v475, 0
        %v540 = vsel %vm505, %v476, 0
        %v543 = vsel %vm505, %v477, 0
        %v546 = vsel %vm505, %v478, 0
        %v549 = vsel %vm505, %v479, 0
        %v552 = vsel %vm505, %v480, 0
        %554 = vmatprep.subr.bf16.mxu0 0
        %555 = vmatpush1.bf16.msra.mxu0 0
        %556 = vmatprep.subr.bf16.mxu0 0
        %557 = vmatpush1.bf16.msra.mxu0 0
        %558 = vmatprep.subr.bf16.mxu0 0
        %559 = vmatpush1.bf16.msra.mxu0 0
        %560 = vmatprep.subr.bf16.mxu0 0
        %561 = vmatpush1.bf16.msra.mxu0 0
        %562 = vmatprep.subr.bf16.mxu0 0
        %563 = vmatpush1.bf16.msra.mxu0 %v500
        %564 = vmatprep.subr.bf16.mxu0 0
        %565 = vmatpush1.bf16.msra.mxu0 %v499
        %566 = vmatprep.subr.bf16.mxu0 0
        %567 = vmatpush1.bf16.msra.mxu0 %v498
        %568 = vmatprep.subr.bf16.mxu0 0
        %569 = vmatpush1.bf16.msra.mxu0 %v497
        %570 = vmatprep.subr.bf16.mxu0 0
        %571 = vmatpush2.bf16.msra.mxu0 0
        %572 = vmatprep.subr.bf16.mxu0 0
        %573 = vmatpush2.bf16.msra.mxu0 0
        %574 = vmatprep.subr.bf16.mxu0 0
        %575 = vmatpush2.bf16.msra.mxu0 0
        %576 = vmatprep.subr.bf16.mxu0 0
        %577 = vmatpush2.bf16.msra.mxu0 0
        %578 = vmatprep.subr.bf16.mxu0 0
        %579 = vmatpush2.bf16.msra.mxu0 0
        %580 = vmatprep.subr.bf16.mxu0 0
        %581 = vmatpush2.bf16.msra.mxu0 0
        %582 = vmatprep.subr.bf16.mxu0 0
        %583 = vmatpush2.bf16.msra.mxu0 0
        %584 = vmatprep.subr.bf16.mxu0 0
        %585 = vmatpush2.bf16.msra.mxu0 0
        %586 = vmatprep.mubr.bf16.mxu0 0
        %587 = vmatmul.mubr.bf16.gmra.mxu0 %v507
        %v588 = vpop.f32.mrf.mxu0
        %v589 = vadd.f32 %v399, %v588
        %v590 = vpop.f32.mrf.mxu0
        %v591 = vpop.f32.mrf.mxu0
        %v592 = vadd.f32 %v399, %v591
        %v593 = vpop.f32.mrf.mxu0
        %594 = vmatprep.mubr.bf16.mxu0 0
        %595 = vmatmul.mubr.bf16.gmra.mxu0 %v510
        %v596 = vpop.f32.mrf.mxu0
        %v597 = vadd.f32 %v399, %v596
        %v598 = vpop.f32.mrf.mxu0
        %v599 = vpop.f32.mrf.mxu0
        %v600 = vadd.f32 %v399, %v599
        %v601 = vpop.f32.mrf.mxu0
        %602 = vmatprep.mubr.bf16.mxu0 0
        %603 = vmatmul.mubr.bf16.gmra.mxu0 %v513
        %v604 = vpop.f32.mrf.mxu0
        %v605 = vadd.f32 %v399, %v604
        %v606 = vpop.f32.mrf.mxu0
        %v607 = vpop.f32.mrf.mxu0
        %v608 = vadd.f32 %v399, %v607
        %v609 = vpop.f32.mrf.mxu0
        %610 = vmatprep.mubr.bf16.mxu0 0
        %611 = vmatmul.mubr.bf16.gmra.mxu0 %v516
        %v612 = vpop.f32.mrf.mxu0
        %v613 = vadd.f32 %v399, %v612
        %v614 = vpop.f32.mrf.mxu0
        %v615 = vpop.f32.mrf.mxu0
        %v616 = vadd.f32 %v399, %v615
        %v617 = vpop.f32.mrf.mxu0
        %618 = vmatprep.mubr.bf16.mxu0 0
        %619 = vmatmul.mubr.bf16.gmra.mxu0 %v519
        %v620 = vpop.f32.mrf.mxu0
        %v621 = vadd.f32 %v399, %v620
        %v622 = vpop.f32.mrf.mxu0
        %v623 = vpop.f32.mrf.mxu0
        %v624 = vadd.f32 %v399, %v623
        %v625 = vpop.f32.mrf.mxu0
        %626 = vmatprep.mubr.bf16.mxu0 0
        %627 = vmatmul.mubr.bf16.gmra.mxu0 %v522
        %v628 = vpop.f32.mrf.mxu0
        %v629 = vadd.f32 %v399, %v628
        %v630 = vpop.f32.mrf.mxu0
        %v631 = vpop.f32.mrf.mxu0
        %v632 = vadd.f32 %v399, %v631
        %v633 = vpop.f32.mrf.mxu0
        %634 = vmatprep.mubr.bf16.mxu0 0
        %635 = vmatmul.mubr.bf16.gmra.mxu0 %v525
        %v636 = vpop.f32.mrf.mxu0
        %v637 = vadd.f32 %v399, %v636
        %v638 = vpop.f32.mrf.mxu0
        %v639 = vpop.f32.mrf.mxu0
        %v640 = vadd.f32 %v399, %v639
        %v641 = vpop.f32.mrf.mxu0
        %642 = vmatprep.mubr.bf16.mxu0 0
        %643 = vmatmul.mubr.bf16.gmra.mxu0 %v528
        %v644 = vpop.f32.mrf.mxu0
        %v645 = vadd.f32 %v399, %v644
        %v646 = vpop.f32.mrf.mxu0
        %v647 = vpop.f32.mrf.mxu0
        %v648 = vadd.f32 %v399, %v647
        %v649 = vpop.f32.mrf.mxu0
        %650 = vmatprep.mubr.bf16.mxu0 0
        %651 = vmatmul.mubr.bf16.gmra.mxu0 %v531
        %v652 = vpop.f32.mrf.mxu0
        %v653 = vadd.f32 %v399, %v652
        %v654 = vpop.f32.mrf.mxu0
        %v655 = vpop.f32.mrf.mxu0
        %v656 = vadd.f32 %v399, %v655
        %v657 = vpop.f32.mrf.mxu0
        %658 = vmatprep.mubr.bf16.mxu0 0
        %659 = vmatmul.mubr.bf16.gmra.mxu0 %v534
        %v660 = vpop.f32.mrf.mxu0
        %v661 = vadd.f32 %v399, %v660
        %v662 = vpop.f32.mrf.mxu0
        %v663 = vpop.f32.mrf.mxu0
        %v664 = vadd.f32 %v399, %v663
        %v665 = vpop.f32.mrf.mxu0
        %666 = vmatprep.mubr.bf16.mxu0 0
        %667 = vmatmul.mubr.bf16.gmra.mxu0 %v537
        %v668 = vpop.f32.mrf.mxu0
        %v669 = vadd.f32 %v399, %v668
        %v670 = vpop.f32.mrf.mxu0
        %v671 = vpop.f32.mrf.mxu0
        %v672 = vadd.f32 %v399, %v671
        %v673 = vpop.f32.mrf.mxu0
        %674 = vmatprep.mubr.bf16.mxu0 0
        %675 = vmatmul.mubr.bf16.gmra.mxu0 %v540
        %v676 = vpop.f32.mrf.mxu0
        %v677 = vadd.f32 %v399, %v676
        %v678 = vpop.f32.mrf.mxu0
        %v679 = vpop.f32.mrf.mxu0
        %v680 = vadd.f32 %v399, %v679
        %v681 = vpop.f32.mrf.mxu0
        %682 = vmatprep.mubr.bf16.mxu0 0
        %683 = vmatmul.mubr.bf16.gmra.mxu0 %v543
        %v684 = vpop.f32.mrf.mxu0
        %v685 = vadd.f32 %v399, %v684
        %v686 = vpop.f32.mrf.mxu0
        %v687 = vpop.f32.mrf.mxu0
        %v688 = vadd.f32 %v399, %v687
        %v689 = vpop.f32.mrf.mxu0
        %690 = vmatprep.mubr.bf16.mxu0 0
        %691 = vmatmul.mubr.bf16.gmra.mxu0 %v546
        %v692 = vpop.f32.mrf.mxu0
        %v693 = vadd.f32 %v399, %v692
        %v694 = vpop.f32.mrf.mxu0
        %v695 = vpop.f32.mrf.mxu0
        %v696 = vadd.f32 %v399, %v695
        %v697 = vpop.f32.mrf.mxu0
        %698 = vmatprep.mubr.bf16.mxu0 0
        %699 = vmatmul.mubr.bf16.gmra.mxu0 %v549
        %v700 = vpop.f32.mrf.mxu0
        %v701 = vadd.f32 %v399, %v700
        %v702 = vpop.f32.mrf.mxu0
        %v703 = vpop.f32.mrf.mxu0
        %v704 = vadd.f32 %v399, %v703
        %v705 = vpop.f32.mrf.mxu0
        %706 = vmatprep.mubr.bf16.mxu0 0
        %707 = vmatmul.mubr.bf16.gmra.mxu0 %v552
        %v708 = vpop.f32.mrf.mxu0
        %v709 = vadd.f32 %v399, %v708
        %v710 = vpop.f32.mrf.mxu0
        %v711 = vpop.f32.mrf.mxu0
        %v712 = vadd.f32 %v399, %v711
        %v713 = vpop.f32.mrf.mxu0
        %714 = vdwg.mxu0
        %v715 = vmax.f32 %v589, 0.0
        %v716 = vmax.f32 %v592, 0.0
        %v717 = vmax.f32 %v597, 0.0
        %v718 = vmax.f32 %v600, 0.0
        %v719 = vmax.f32 %v605, 0.0
        %v720 = vmax.f32 %v608, 0.0
        %v721 = vmax.f32 %v613, 0.0
        %v722 = vmax.f32 %v616, 0.0
        %v723 = vmax.f32 %v621, 0.0
        %v724 = vmax.f32 %v624, 0.0
        %v725 = vmax.f32 %v629, 0.0
        %v726 = vmax.f32 %v632, 0.0
        %v727 = vmax.f32 %v637, 0.0
        %v728 = vmax.f32 %v640, 0.0
        %v729 = vmax.f32 %v645, 0.0
        %v730 = vmax.f32 %v648, 0.0
        %v731 = vmax.f32 %v653, 0.0
        %v732 = vmax.f32 %v656, 0.0
        %v733 = vmax.f32 %v661, 0.0
        %v734 = vmax.f32 %v664, 0.0
        %v735 = vmax.f32 %v669, 0.0
        %v736 = vmax.f32 %v672, 0.0
        %v737 = vmax.f32 %v677, 0.0
        %v738 = vmax.f32 %v680, 0.0
        %v739 = vmax.f32 %v685, 0.0
        %v740 = vmax.f32 %v688, 0.0
        %v741 = vmax.f32 %v693, 0.0
        %v742 = vmax.f32 %v696, 0.0
        %v743 = vmax.f32 %v701, 0.0
        %v744 = vmax.f32 %v704, 0.0
        %v745 = vmax.f32 %v709, 0.0
        %v746 = vmax.f32 %v712, 0.0
        %v747 = vld [vmem:[%s4] sm:$0x1]
        %v749 = vlaneseq
        %v750 = vshrl.u32 %v749, 7
        %v751 = vsub.s32 0, %v750
        %v752 = vrot.slane %v747, %v751
        %v754 = vmul.f32 %v715, %v752
        %v755 = vmul.f32 %v716, %v752
        %v756 = vmul.f32 %v717, %v752
        %v757 = vmul.f32 %v718, %v752
        %v758 = vmul.f32 %v719, %v752
        %v759 = vmul.f32 %v720, %v752
        %v760 = vmul.f32 %v721, %v752
        %v761 = vmul.f32 %v722, %v752
        %v762 = vmul.f32 %v723, %v752
        %v763 = vmul.f32 %v724, %v752
        %v764 = vmul.f32 %v725, %v752
        %v765 = vmul.f32 %v726, %v752
        %v766 = vmul.f32 %v727, %v752
        %v767 = vmul.f32 %v728, %v752
        %v768 = vmul.f32 %v729, %v752
        %v769 = vmul.f32 %v730, %v752
        %v770 = vmul.f32 %v731, %v752
        %v771 = vmul.f32 %v732, %v752
        %v772 = vmul.f32 %v733, %v752
        %v773 = vmul.f32 %v734, %v752
        %v774 = vmul.f32 %v735, %v752
        %v775 = vmul.f32 %v736, %v752
        %v776 = vmul.f32 %v737, %v752
        %v777 = vmul.f32 %v738, %v752
        %v778 = vmul.f32 %v739, %v752
        %v779 = vmul.f32 %v740, %v752
        %v780 = vmul.f32 %v741, %v752
        %v781 = vmul.f32 %v742, %v752
        %v782 = vmul.f32 %v743, %v752
        %v783 = vmul.f32 %v744, %v752
        %v784 = vmul.f32 %v745, %v752
        %v785 = vmul.f32 %v746, %v752
        %v786 = vsel %vm505, %v754, 0.0
        %787 = vadd.xlane.f32.xlu0 %v786
        %v788 = vpop.xlane.xlu0 %787
        %v789 = vsel %vm505, %v755, 0.0
        %790 = vadd.xlane.f32.xlu0 %v789
        %v791 = vpop.xlane.xlu0 %790
        %v792 = vsel %vm505, %v756, 0.0
        %793 = vadd.xlane.f32.xlu0 %v792
        %v794 = vpop.xlane.xlu0 %793
        %v795 = vsel %vm505, %v757, 0.0
        %796 = vadd.xlane.f32.xlu0 %v795
        %v797 = vpop.xlane.xlu0 %796
        %v798 = vsel %vm505, %v758, 0.0
        %799 = vadd.xlane.f32.xlu0 %v798
        %v800 = vpop.xlane.xlu0 %799
        %v801 = vsel %vm505, %v759, 0.0
        %802 = vadd.xlane.f32.xlu0 %v801
        %v803 = vpop.xlane.xlu0 %802
        %v804 = vsel %vm505, %v760, 0.0
        %805 = vadd.xlane.f32.xlu0 %v804
        %v806 = vpop.xlane.xlu0 %805
        %v807 = vsel %vm505, %v761, 0.0
        %808 = vadd.xlane.f32.xlu0 %v807
        %v809 = vpop.xlane.xlu0 %808
        %v810 = vsel %vm505, %v762, 0.0
        %811 = vadd.xlane.f32.xlu0 %v810
        %v812 = vpop.xlane.xlu0 %811
        %v813 = vsel %vm505, %v763, 0.0
        %814 = vadd.xlane.f32.xlu0 %v813
        %v815 = vpop.xlane.xlu0 %814
        %v816 = vsel %vm505, %v764, 0.0
        %817 = vadd.xlane.f32.xlu0 %v816
        %v818 = vpop.xlane.xlu0 %817
        %v819 = vsel %vm505, %v765, 0.0
        %820 = vadd.xlane.f32.xlu0 %v819
        %v821 = vpop.xlane.xlu0 %820
        %v822 = vsel %vm505, %v766, 0.0
        %823 = vadd.xlane.f32.xlu0 %v822
        %v824 = vpop.xlane.xlu0 %823
        %v825 = vsel %vm505, %v767, 0.0
        %826 = vadd.xlane.f32.xlu0 %v825
        %v827 = vpop.xlane.xlu0 %826
        %v828 = vsel %vm505, %v768, 0.0
        %829 = vadd.xlane.f32.xlu0 %v828
        %v830 = vpop.xlane.xlu0 %829
        %v831 = vsel %vm505, %v769, 0.0
        %832 = vadd.xlane.f32.xlu0 %v831
        %v833 = vpop.xlane.xlu0 %832
        %v834 = vsel %vm505, %v770, 0.0
        %835 = vadd.xlane.f32.xlu0 %v834
        %v836 = vpop.xlane.xlu0 %835
        %v837 = vsel %vm505, %v771, 0.0
        %838 = vadd.xlane.f32.xlu0 %v837
        %v839 = vpop.xlane.xlu0 %838
        %v840 = vsel %vm505, %v772, 0.0
        %841 = vadd.xlane.f32.xlu0 %v840
        %v842 = vpop.xlane.xlu0 %841
        %v843 = vsel %vm505, %v773, 0.0
        %844 = vadd.xlane.f32.xlu0 %v843
        %v845 = vpop.xlane.xlu0 %844
        %v846 = vsel %vm505, %v774, 0.0
        %847 = vadd.xlane.f32.xlu0 %v846
        %v848 = vpop.xlane.xlu0 %847
        %v849 = vsel %vm505, %v775, 0.0
        %850 = vadd.xlane.f32.xlu0 %v849
        %v851 = vpop.xlane.xlu0 %850
        %v852 = vsel %vm505, %v776, 0.0
        %853 = vadd.xlane.f32.xlu0 %v852
        %v854 = vpop.xlane.xlu0 %853
        %v855 = vsel %vm505, %v777, 0.0
        %856 = vadd.xlane.f32.xlu0 %v855
        %v857 = vpop.xlane.xlu0 %856
        %v858 = vsel %vm505, %v778, 0.0
        %859 = vadd.xlane.f32.xlu0 %v858
        %v860 = vpop.xlane.xlu0 %859
        %v861 = vsel %vm505, %v779, 0.0
        %862 = vadd.xlane.f32.xlu0 %v861
        %v863 = vpop.xlane.xlu0 %862
        %v864 = vsel %vm505, %v780, 0.0
        %865 = vadd.xlane.f32.xlu0 %v864
        %v866 = vpop.xlane.xlu0 %865
        %v867 = vsel %vm505, %v781, 0.0
        %868 = vadd.xlane.f32.xlu0 %v867
        %v869 = vpop.xlane.xlu0 %868
        %v870 = vsel %vm505, %v782, 0.0
        %871 = vadd.xlane.f32.xlu0 %v870
        %v872 = vpop.xlane.xlu0 %871
        %v873 = vsel %vm505, %v783, 0.0
        %874 = vadd.xlane.f32.xlu0 %v873
        %v875 = vpop.xlane.xlu0 %874
        %v876 = vsel %vm505, %v784, 0.0
        %877 = vadd.xlane.f32.xlu0 %v876
        %v878 = vpop.xlane.xlu0 %877
        %v879 = vsel %vm505, %v785, 0.0
        %880 = vadd.xlane.f32.xlu0 %v879
        %v881 = vpop.xlane.xlu0 %880
        %v882 = vlaneseq
        %v883 = vand.u32 %v882, 127
        %v884 = vld [vmem:[%s340] sm:$0xff]
        %v885 = vld [vmem:[%s340 + $0x8] sm:$0xff]
        %v886 = vld [vmem:[%s340 + $0x10] sm:$0xff]
        %v887 = vld [vmem:[%s340 + $0x18] sm:$0xff]
        %v888 = vld [vmem:[%s340 + $0x20] sm:$0xff]
        %v889 = vld [vmem:[%s340 + $0x28] sm:$0xff]
        %v890 = vld [vmem:[%s340 + $0x30] sm:$0xff]
        %v891 = vld [vmem:[%s340 + $0x38] sm:$0xff]
        %v892 = vld [vmem:[%s340 + $0x40] sm:$0xff]
        %v893 = vld [vmem:[%s340 + $0x48] sm:$0xff]
        %v894 = vld [vmem:[%s340 + $0x50] sm:$0xff]
        %v895 = vld [vmem:[%s340 + $0x58] sm:$0xff]
        %v896 = vld [vmem:[%s340 + $0x60] sm:$0xff]
        %v897 = vld [vmem:[%s340 + $0x68] sm:$0xff]
        %v898 = vld [vmem:[%s340 + $0x70] sm:$0xff]
        %v899 = vld [vmem:[%s340 + $0x78] sm:$0xff]
        %v900 = vld [vmem:[%s340 + $0x80] sm:$0xff]
        %v901 = vld [vmem:[%s340 + $0x88] sm:$0xff]
        %v902 = vld [vmem:[%s340 + $0x90] sm:$0xff]
        %v903 = vld [vmem:[%s340 + $0x98] sm:$0xff]
        %v904 = vld [vmem:[%s340 + $0xa0] sm:$0xff]
        %v905 = vld [vmem:[%s340 + $0xa8] sm:$0xff]
        %v906 = vld [vmem:[%s340 + $0xb0] sm:$0xff]
        %v907 = vld [vmem:[%s340 + $0xb8] sm:$0xff]
        %v908 = vld [vmem:[%s340 + $0xc0] sm:$0xff]
        %v909 = vld [vmem:[%s340 + $0xc8] sm:$0xff]
        %v910 = vld [vmem:[%s340 + $0xd0] sm:$0xff]
        %v911 = vld [vmem:[%s340 + $0xd8] sm:$0xff]
        %v912 = vld [vmem:[%s340 + $0xe0] sm:$0xff]
        %v913 = vld [vmem:[%s340 + $0xe8] sm:$0xff]
        %v914 = vld [vmem:[%s340 + $0xf0] sm:$0xff]
        %v915 = vld [vmem:[%s340 + $0xf8] sm:$0xff]
        %916 = vset.pattern.permute.xlu0 0
        %917 = vperm.xlu0 %916, %v884
        %v918 = vpop.permute.xlu0 %917
        %919 = vset.pattern.permute.xlu0 0
        %920 = vperm.xlu0 %919, %v885
        %v921 = vpop.permute.xlu0 %920
        %922 = vset.pattern.permute.xlu0 0
        %923 = vperm.xlu0 %922, %v886
        %v924 = vpop.permute.xlu0 %923
        %925 = vset.pattern.permute.xlu0 0
        %926 = vperm.xlu0 %925, %v887
        %v927 = vpop.permute.xlu0 %926
        %928 = vset.pattern.permute.xlu0 0
        %929 = vperm.xlu0 %928, %v888
        %v930 = vpop.permute.xlu0 %929
        %931 = vset.pattern.permute.xlu0 0
        %932 = vperm.xlu0 %931, %v889
        %v933 = vpop.permute.xlu0 %932
        %934 = vset.pattern.permute.xlu0 0
        %935 = vperm.xlu0 %934, %v890
        %v936 = vpop.permute.xlu0 %935
        %937 = vset.pattern.permute.xlu0 0
        %938 = vperm.xlu0 %937, %v891
        %v939 = vpop.permute.xlu0 %938
        %940 = vset.pattern.permute.xlu0 0
        %941 = vperm.xlu0 %940, %v892
        %v942 = vpop.permute.xlu0 %941
        %943 = vset.pattern.permute.xlu0 0
        %944 = vperm.xlu0 %943, %v893
        %v945 = vpop.permute.xlu0 %944
        %946 = vset.pattern.permute.xlu0 0
        %947 = vperm.xlu0 %946, %v894
        %v948 = vpop.permute.xlu0 %947
        %949 = vset.pattern.permute.xlu0 0
        %950 = vperm.xlu0 %949, %v895
        %v951 = vpop.permute.xlu0 %950
        %952 = vset.pattern.permute.xlu0 0
        %953 = vperm.xlu0 %952, %v896
        %v954 = vpop.permute.xlu0 %953
        %955 = vset.pattern.permute.xlu0 0
        %956 = vperm.xlu0 %955, %v897
        %v957 = vpop.permute.xlu0 %956
        %958 = vset.pattern.permute.xlu0 0
        %959 = vperm.xlu0 %958, %v898
        %v960 = vpop.permute.xlu0 %959
        %961 = vset.pattern.permute.xlu0 0
        %962 = vperm.xlu0 %961, %v899
        %v963 = vpop.permute.xlu0 %962
        %964 = vset.pattern.permute.xlu0 0
        %965 = vperm.xlu0 %964, %v900
        %v966 = vpop.permute.xlu0 %965
        %967 = vset.pattern.permute.xlu0 0
        %968 = vperm.xlu0 %967, %v901
        %v969 = vpop.permute.xlu0 %968
        %970 = vset.pattern.permute.xlu0 0
        %971 = vperm.xlu0 %970, %v902
        %v972 = vpop.permute.xlu0 %971
        %973 = vset.pattern.permute.xlu0 0
        %974 = vperm.xlu0 %973, %v903
        %v975 = vpop.permute.xlu0 %974
        %976 = vset.pattern.permute.xlu0 0
        %977 = vperm.xlu0 %976, %v904
        %v978 = vpop.permute.xlu0 %977
        %979 = vset.pattern.permute.xlu0 0
        %980 = vperm.xlu0 %979, %v905
        %v981 = vpop.permute.xlu0 %980
        %982 = vset.pattern.permute.xlu0 0
        %983 = vperm.xlu0 %982, %v906
        %v984 = vpop.permute.xlu0 %983
        %985 = vset.pattern.permute.xlu0 0
        %986 = vperm.xlu0 %985, %v907
        %v987 = vpop.permute.xlu0 %986
        %988 = vset.pattern.permute.xlu0 0
        %989 = vperm.xlu0 %988, %v908
        %v990 = vpop.permute.xlu0 %989
        %991 = vset.pattern.permute.xlu0 0
        %992 = vperm.xlu0 %991, %v909
        %v993 = vpop.permute.xlu0 %992
        %994 = vset.pattern.permute.xlu0 0
        %995 = vperm.xlu0 %994, %v910
        %v996 = vpop.permute.xlu0 %995
        %997 = vset.pattern.permute.xlu0 0
        %998 = vperm.xlu0 %997, %v911
        %v999 = vpop.permute.xlu0 %998
        %1000 = vset.pattern.permute.xlu0 0
        %1001 = vperm.xlu0 %1000, %v912
        %v1002 = vpop.permute.xlu0 %1001
        %1003 = vset.pattern.permute.xlu0 0
        %1004 = vperm.xlu0 %1003, %v913
        %v1005 = vpop.permute.xlu0 %1004
        %1006 = vset.pattern.permute.xlu0 0
        %1007 = vperm.xlu0 %1006, %v914
        %v1008 = vpop.permute.xlu0 %1007
        %1009 = vset.pattern.permute.xlu0 0
        %1010 = vperm.xlu0 %1009, %v915
        %v1011 = vpop.permute.xlu0 %1010
        %vm1012 = vcmp.eq.s32.totalorder %v918, %v883
        %vm1013 = vcmp.eq.s32.totalorder %v921, %v883
        %vm1014 = vcmp.eq.s32.totalorder %v924, %v883
        %vm1015 = vcmp.eq.s32.totalorder %v927, %v883
        %vm1016 = vcmp.eq.s32.totalorder %v930, %v883
        %vm1017 = vcmp.eq.s32.totalorder %v933, %v883
        %vm1018 = vcmp.eq.s32.totalorder %v936, %v883
        %vm1019 = vcmp.eq.s32.totalorder %v939, %v883
        %vm1020 = vcmp.eq.s32.totalorder %v942, %v883
        %vm1021 = vcmp.eq.s32.totalorder %v945, %v883
        %vm1022 = vcmp.eq.s32.totalorder %v948, %v883
        %vm1023 = vcmp.eq.s32.totalorder %v951, %v883
        %vm1024 = vcmp.eq.s32.totalorder %v954, %v883
        %vm1025 = vcmp.eq.s32.totalorder %v957, %v883
        %vm1026 = vcmp.eq.s32.totalorder %v960, %v883
        %vm1027 = vcmp.eq.s32.totalorder %v963, %v883
        %vm1028 = vcmp.eq.s32.totalorder %v966, %v883
        %vm1029 = vcmp.eq.s32.totalorder %v969, %v883
        %vm1030 = vcmp.eq.s32.totalorder %v972, %v883
        %vm1031 = vcmp.eq.s32.totalorder %v975, %v883
        %vm1032 = vcmp.eq.s32.totalorder %v978, %v883
        %vm1033 = vcmp.eq.s32.totalorder %v981, %v883
        %vm1034 = vcmp.eq.s32.totalorder %v984, %v883
        %vm1035 = vcmp.eq.s32.totalorder %v987, %v883
        %vm1036 = vcmp.eq.s32.totalorder %v990, %v883
        %vm1037 = vcmp.eq.s32.totalorder %v993, %v883
        %vm1038 = vcmp.eq.s32.totalorder %v996, %v883
        %vm1039 = vcmp.eq.s32.totalorder %v999, %v883
        %vm1040 = vcmp.eq.s32.totalorder %v1002, %v883
        %vm1041 = vcmp.eq.s32.totalorder %v1005, %v883
        %vm1042 = vcmp.eq.s32.totalorder %v1008, %v883
        %vm1043 = vcmp.eq.s32.totalorder %v1011, %v883
        %v1044 = vsel %vm1012, 1, 0
        %v1045 = vsel %vm1013, 1, 0
        %v1046 = vsel %vm1014, 1, 0
        %v1047 = vsel %vm1015, 1, 0
        %v1048 = vsel %vm1016, 1, 0
        %v1049 = vsel %vm1017, 1, 0
        %v1050 = vsel %vm1018, 1, 0
        %v1051 = vsel %vm1019, 1, 0
        %v1052 = vsel %vm1020, 1, 0
        %v1053 = vsel %vm1021, 1, 0
        %v1054 = vsel %vm1022, 1, 0
        %v1055 = vsel %vm1023, 1, 0
        %v1056 = vsel %vm1024, 1, 0
        %v1057 = vsel %vm1025, 1, 0
        %v1058 = vsel %vm1026, 1, 0
        %v1059 = vsel %vm1027, 1, 0
        %v1060 = vsel %vm1028, 1, 0
        %v1061 = vsel %vm1029, 1, 0
        %v1062 = vsel %vm1030, 1, 0
        %v1063 = vsel %vm1031, 1, 0
        %v1064 = vsel %vm1032, 1, 0
        %v1065 = vsel %vm1033, 1, 0
        %v1066 = vsel %vm1034, 1, 0
        %v1067 = vsel %vm1035, 1, 0
        %v1068 = vsel %vm1036, 1, 0
        %v1069 = vsel %vm1037, 1, 0
        %v1070 = vsel %vm1038, 1, 0
        %v1071 = vsel %vm1039, 1, 0
        %v1072 = vsel %vm1040, 1, 0
        %v1073 = vsel %vm1041, 1, 0
        %v1074 = vsel %vm1042, 1, 0
        %v1075 = vsel %vm1043, 1, 0
        %v1076 = vcvt.s32.f32 %v1044
        %v1077 = vcvt.s32.f32 %v1045
        %v1078 = vcvt.s32.f32 %v1046
        %v1079 = vcvt.s32.f32 %v1047
        %v1080 = vcvt.s32.f32 %v1048
        %v1081 = vcvt.s32.f32 %v1049
        %v1082 = vcvt.s32.f32 %v1050
        %v1083 = vcvt.s32.f32 %v1051
        %v1084 = vcvt.s32.f32 %v1052
        %v1085 = vcvt.s32.f32 %v1053
        %v1086 = vcvt.s32.f32 %v1054
        %v1087 = vcvt.s32.f32 %v1055
        %v1088 = vcvt.s32.f32 %v1056
        %v1089 = vcvt.s32.f32 %v1057
        %v1090 = vcvt.s32.f32 %v1058
        %v1091 = vcvt.s32.f32 %v1059
        %v1092 = vcvt.s32.f32 %v1060
        %v1093 = vcvt.s32.f32 %v1061
        %v1094 = vcvt.s32.f32 %v1062
        %v1095 = vcvt.s32.f32 %v1063
        %v1096 = vcvt.s32.f32 %v1064
        %v1097 = vcvt.s32.f32 %v1065
        %v1098 = vcvt.s32.f32 %v1066
        %v1099 = vcvt.s32.f32 %v1067
        %v1100 = vcvt.s32.f32 %v1068
        %v1101 = vcvt.s32.f32 %v1069
        %v1102 = vcvt.s32.f32 %v1070
        %v1103 = vcvt.s32.f32 %v1071
        %v1104 = vcvt.s32.f32 %v1072
        %v1105 = vcvt.s32.f32 %v1073
        %v1106 = vcvt.s32.f32 %v1074
        %v1107 = vcvt.s32.f32 %v1075
        %v1108 = vsub.f32 %v1076, 1.0
        %v1109 = vsub.f32 %v1077, 1.0
        %v1110 = vsub.f32 %v1078, 1.0
        %v1111 = vsub.f32 %v1079, 1.0
        %v1112 = vsub.f32 %v1080, 1.0
        %v1113 = vsub.f32 %v1081, 1.0
        %v1114 = vsub.f32 %v1082, 1.0
        %v1115 = vsub.f32 %v1083, 1.0
        %v1116 = vsub.f32 %v1084, 1.0
        %v1117 = vsub.f32 %v1085, 1.0
        %v1118 = vsub.f32 %v1086, 1.0
        %v1119 = vsub.f32 %v1087, 1.0
        %v1120 = vsub.f32 %v1088, 1.0
        %v1121 = vsub.f32 %v1089, 1.0
        %v1122 = vsub.f32 %v1090, 1.0
        %v1123 = vsub.f32 %v1091, 1.0
        %v1124 = vsub.f32 %v1092, 1.0
        %v1125 = vsub.f32 %v1093, 1.0
        %v1126 = vsub.f32 %v1094, 1.0
        %v1127 = vsub.f32 %v1095, 1.0
        %v1128 = vsub.f32 %v1096, 1.0
        %v1129 = vsub.f32 %v1097, 1.0
        %v1130 = vsub.f32 %v1098, 1.0
        %v1131 = vsub.f32 %v1099, 1.0
        %v1132 = vsub.f32 %v1100, 1.0
        %v1133 = vsub.f32 %v1101, 1.0
        %v1134 = vsub.f32 %v1102, 1.0
        %v1135 = vsub.f32 %v1103, 1.0
        %v1136 = vsub.f32 %v1104, 1.0
        %v1137 = vsub.f32 %v1105, 1.0
        %v1138 = vsub.f32 %v1106, 1.0
        %v1139 = vsub.f32 %v1107, 1.0
        %v1140 = vmul.f32 %v1108, 1e+30
        %v1141 = vmul.f32 %v1109, 1e+30
        %v1142 = vmul.f32 %v1110, 1e+30
        %v1143 = vmul.f32 %v1111, 1e+30
        %v1144 = vmul.f32 %v1112, 1e+30
        %v1145 = vmul.f32 %v1113, 1e+30
        %v1146 = vmul.f32 %v1114, 1e+30
        %v1147 = vmul.f32 %v1115, 1e+30
        %v1148 = vmul.f32 %v1116, 1e+30
        %v1149 = vmul.f32 %v1117, 1e+30
        %v1150 = vmul.f32 %v1118, 1e+30
        %v1151 = vmul.f32 %v1119, 1e+30
        %v1152 = vmul.f32 %v1120, 1e+30
        %v1153 = vmul.f32 %v1121, 1e+30
        %v1154 = vmul.f32 %v1122, 1e+30
        %v1155 = vmul.f32 %v1123, 1e+30
        %v1156 = vmul.f32 %v1124, 1e+30
        %v1157 = vmul.f32 %v1125, 1e+30
        %v1158 = vmul.f32 %v1126, 1e+30
        %v1159 = vmul.f32 %v1127, 1e+30
        %v1160 = vmul.f32 %v1128, 1e+30
        %v1161 = vmul.f32 %v1129, 1e+30
        %v1162 = vmul.f32 %v1130, 1e+30
        %v1163 = vmul.f32 %v1131, 1e+30
        %v1164 = vmul.f32 %v1132, 1e+30
        %v1165 = vmul.f32 %v1133, 1e+30
        %v1166 = vmul.f32 %v1134, 1e+30
        %v1167 = vmul.f32 %v1135, 1e+30
        %v1168 = vmul.f32 %v1136, 1e+30
        %v1169 = vmul.f32 %v1137, 1e+30
        %v1170 = vmul.f32 %v1138, 1e+30
        %v1171 = vmul.f32 %v1139, 1e+30
        %v1172 = vadd.f32 %v788, %v1140
        %v1173 = vadd.f32 %v791, %v1141
        %v1174 = vadd.f32 %v794, %v1142
        %v1175 = vadd.f32 %v797, %v1143
        %v1176 = vadd.f32 %v800, %v1144
        %v1177 = vadd.f32 %v803, %v1145
        %v1178 = vadd.f32 %v806, %v1146
        %v1179 = vadd.f32 %v809, %v1147
        %v1180 = vadd.f32 %v812, %v1148
        %v1181 = vadd.f32 %v815, %v1149
        %v1182 = vadd.f32 %v818, %v1150
        %v1183 = vadd.f32 %v821, %v1151
        %v1184 = vadd.f32 %v824, %v1152
        %v1185 = vadd.f32 %v827, %v1153
        %v1186 = vadd.f32 %v830, %v1154
        %v1187 = vadd.f32 %v833, %v1155
        %v1188 = vadd.f32 %v836, %v1156
        %v1189 = vadd.f32 %v839, %v1157
        %v1190 = vadd.f32 %v842, %v1158
        %v1191 = vadd.f32 %v845, %v1159
        %v1192 = vadd.f32 %v848, %v1160
        %v1193 = vadd.f32 %v851, %v1161
        %v1194 = vadd.f32 %v854, %v1162
        %v1195 = vadd.f32 %v857, %v1163
        %v1196 = vadd.f32 %v860, %v1164
        %v1197 = vadd.f32 %v863, %v1165
        %v1198 = vadd.f32 %v866, %v1166
        %v1199 = vadd.f32 %v869, %v1167
        %v1200 = vadd.f32 %v872, %v1168
        %v1201 = vadd.f32 %v875, %v1169
        %v1202 = vadd.f32 %v878, %v1170
        %v1203 = vadd.f32 %v881, %v1171
        %v1204 = vld [vmem:[#allocation3] sm:$0x1]
        %v1205 = vmax.f32 %v1172, %v1176
        %v1206 = vmax.f32 %v1173, %v1177
        %v1207 = vmax.f32 %v1174, %v1178
        %v1208 = vmax.f32 %v1175, %v1179
        %v1209 = vmax.f32 %v1205, %v1180
        %v1210 = vmax.f32 %v1206, %v1181
        %v1211 = vmax.f32 %v1207, %v1182
        %v1212 = vmax.f32 %v1208, %v1183
        %v1213 = vmax.f32 %v1209, %v1184
        %v1214 = vmax.f32 %v1210, %v1185
        %v1215 = vmax.f32 %v1211, %v1186
        %v1216 = vmax.f32 %v1212, %v1187
        %v1217 = vmax.f32 %v1213, %v1188
        %v1218 = vmax.f32 %v1214, %v1189
        %v1219 = vmax.f32 %v1215, %v1190
        %v1220 = vmax.f32 %v1216, %v1191
        %v1221 = vmax.f32 %v1217, %v1192
        %v1222 = vmax.f32 %v1218, %v1193
        %v1223 = vmax.f32 %v1219, %v1194
        %v1224 = vmax.f32 %v1220, %v1195
        %v1225 = vmax.f32 %v1221, %v1196
        %v1226 = vmax.f32 %v1222, %v1197
        %v1227 = vmax.f32 %v1223, %v1198
        %v1228 = vmax.f32 %v1224, %v1199
        %v1229 = vmax.f32 %v1225, %v1200
        %v1230 = vmax.f32 %v1226, %v1201
        %v1231 = vmax.f32 %v1227, %v1202
        %v1232 = vmax.f32 %v1228, %v1203
        %v1233 = vmax.f32 %v1229, %v1230
        %v1234 = vmax.f32 %v1231, %v1232
        %v1235 = vmax.f32 %v1233, %v1234
        %v1236 = vrot.slane %v1235, 4
        %v1237 = vmax.f32 %v1235, %v1236
        %v1238 = vrot.slane %v1237, 2
        %v1239 = vmax.f32 %v1237, %v1238
        %v1240 = vrot.slane %v1239, 1
        %v1241 = vmax.f32 %v1239, %v1240
        %v1242 = vmax.f32 %v1204, %v1241
        %v1244 = vlaneseq
        %v1245 = vshrl.u32 %v1244, 7
        %v1246 = vsub.s32 0, %v1245
        %v1247 = vrot.slane %v1242, %v1246
        %v1249 = vmul.f32 %v1076, %v1247
        %v1250 = vmul.f32 %v1077, %v1247
        %v1251 = vmul.f32 %v1078, %v1247
        %v1252 = vmul.f32 %v1079, %v1247
        %v1253 = vmul.f32 %v1080, %v1247
        %v1254 = vmul.f32 %v1081, %v1247
        %v1255 = vmul.f32 %v1082, %v1247
        %v1256 = vmul.f32 %v1083, %v1247
        %v1257 = vmul.f32 %v1084, %v1247
        %v1258 = vmul.f32 %v1085, %v1247
        %v1259 = vmul.f32 %v1086, %v1247
        %v1260 = vmul.f32 %v1087, %v1247
        %v1261 = vmul.f32 %v1088, %v1247
        %v1262 = vmul.f32 %v1089, %v1247
        %v1263 = vmul.f32 %v1090, %v1247
        %v1264 = vmul.f32 %v1091, %v1247
        %v1265 = vmul.f32 %v1092, %v1247
        %v1266 = vmul.f32 %v1093, %v1247
        %v1267 = vmul.f32 %v1094, %v1247
        %v1268 = vmul.f32 %v1095, %v1247
        %v1269 = vmul.f32 %v1096, %v1247
        %v1270 = vmul.f32 %v1097, %v1247
        %v1271 = vmul.f32 %v1098, %v1247
        %v1272 = vmul.f32 %v1099, %v1247
        %v1273 = vmul.f32 %v1100, %v1247
        %v1274 = vmul.f32 %v1101, %v1247
        %v1275 = vmul.f32 %v1102, %v1247
        %v1276 = vmul.f32 %v1103, %v1247
        %v1277 = vmul.f32 %v1104, %v1247
        %v1278 = vmul.f32 %v1105, %v1247
        %v1279 = vmul.f32 %v1106, %v1247
        %v1280 = vmul.f32 %v1107, %v1247
        %1281 = vadd.xlane.f32.xlu0 %v1249
        %v1282 = vpop.xlane.xlu0 %1281
        %1283 = vadd.xlane.f32.xlu0 %v1250
        %v1284 = vpop.xlane.xlu0 %1283
        %1285 = vadd.xlane.f32.xlu0 %v1251
        %v1286 = vpop.xlane.xlu0 %1285
        %1287 = vadd.xlane.f32.xlu0 %v1252
        %v1288 = vpop.xlane.xlu0 %1287
        %1289 = vadd.xlane.f32.xlu0 %v1253
        %v1290 = vpop.xlane.xlu0 %1289
        %1291 = vadd.xlane.f32.xlu0 %v1254
        %v1292 = vpop.xlane.xlu0 %1291
        %1293 = vadd.xlane.f32.xlu0 %v1255
        %v1294 = vpop.xlane.xlu0 %1293
        %1295 = vadd.xlane.f32.xlu0 %v1256
        %v1296 = vpop.xlane.xlu0 %1295
        %1297 = vadd.xlane.f32.xlu0 %v1257
        %v1298 = vpop.xlane.xlu0 %1297
        %1299 = vadd.xlane.f32.xlu0 %v1258
        %v1300 = vpop.xlane.xlu0 %1299
        %1301 = vadd.xlane.f32.xlu0 %v1259
        %v1302 = vpop.xlane.xlu0 %1301
        %1303 = vadd.xlane.f32.xlu0 %v1260
        %v1304 = vpop.xlane.xlu0 %1303
        %1305 = vadd.xlane.f32.xlu0 %v1261
        %v1306 = vpop.xlane.xlu0 %1305
        %1307 = vadd.xlane.f32.xlu0 %v1262
        %v1308 = vpop.xlane.xlu0 %1307
        %1309 = vadd.xlane.f32.xlu0 %v1263
        %v1310 = vpop.xlane.xlu0 %1309
        %1311 = vadd.xlane.f32.xlu0 %v1264
        %v1312 = vpop.xlane.xlu0 %1311
        %1313 = vadd.xlane.f32.xlu0 %v1265
        %v1314 = vpop.xlane.xlu0 %1313
        %1315 = vadd.xlane.f32.xlu0 %v1266
        %v1316 = vpop.xlane.xlu0 %1315
        %1317 = vadd.xlane.f32.xlu0 %v1267
        %v1318 = vpop.xlane.xlu0 %1317
        %1319 = vadd.xlane.f32.xlu0 %v1268
        %v1320 = vpop.xlane.xlu0 %1319
        %1321 = vadd.xlane.f32.xlu0 %v1269
        %v1322 = vpop.xlane.xlu0 %1321
        %1323 = vadd.xlane.f32.xlu0 %v1270
        %v1324 = vpop.xlane.xlu0 %1323
        %1325 = vadd.xlane.f32.xlu0 %v1271
        %v1326 = vpop.xlane.xlu0 %1325
        %1327 = vadd.xlane.f32.xlu0 %v1272
        %v1328 = vpop.xlane.xlu0 %1327
        %1329 = vadd.xlane.f32.xlu0 %v1273
        %v1330 = vpop.xlane.xlu0 %1329
        %1331 = vadd.xlane.f32.xlu0 %v1274
        %v1332 = vpop.xlane.xlu0 %1331
        %1333 = vadd.xlane.f32.xlu0 %v1275
        %v1334 = vpop.xlane.xlu0 %1333
        %1335 = vadd.xlane.f32.xlu0 %v1276
        %v1336 = vpop.xlane.xlu0 %1335
        %1337 = vadd.xlane.f32.xlu0 %v1277
        %v1338 = vpop.xlane.xlu0 %1337
        %1339 = vadd.xlane.f32.xlu0 %v1278
        %v1340 = vpop.xlane.xlu0 %1339
        %1341 = vadd.xlane.f32.xlu0 %v1279
        %v1342 = vpop.xlane.xlu0 %1341
        %1343 = vadd.xlane.f32.xlu0 %v1280
        %v1344 = vpop.xlane.xlu0 %1343
        %v1345 = vsub.f32 %v788, %v1282
        %v1346 = vsub.f32 %v791, %v1284
        %v1347 = vsub.f32 %v794, %v1286
        %v1348 = vsub.f32 %v797, %v1288
        %v1349 = vsub.f32 %v800, %v1290
        %v1350 = vsub.f32 %v803, %v1292
        %v1351 = vsub.f32 %v806, %v1294
        %v1352 = vsub.f32 %v809, %v1296
        %v1353 = vsub.f32 %v812, %v1298
        %v1354 = vsub.f32 %v815, %v1300
        %v1355 = vsub.f32 %v818, %v1302
        %v1356 = vsub.f32 %v821, %v1304
        %v1357 = vsub.f32 %v824, %v1306
        %v1358 = vsub.f32 %v827, %v1308
        %v1359 = vsub.f32 %v830, %v1310
        %v1360 = vsub.f32 %v833, %v1312
        %v1361 = vsub.f32 %v836, %v1314
        %v1362 = vsub.f32 %v839, %v1316
        %v1363 = vsub.f32 %v842, %v1318
        %v1364 = vsub.f32 %v845, %v1320
        %v1365 = vsub.f32 %v848, %v1322
        %v1366 = vsub.f32 %v851, %v1324
        %v1367 = vsub.f32 %v854, %v1326
        %v1368 = vsub.f32 %v857, %v1328
        %v1369 = vsub.f32 %v860, %v1330
        %v1370 = vsub.f32 %v863, %v1332
        %v1371 = vsub.f32 %v866, %v1334
        %v1372 = vsub.f32 %v869, %v1336
        %v1373 = vsub.f32 %v872, %v1338
        %v1374 = vsub.f32 %v875, %v1340
        %v1375 = vsub.f32 %v878, %v1342
        %v1376 = vsub.f32 %v881, %v1344
        %v1377 = vmin.f32 %v1345, 0.0
        %v1378 = vmin.f32 %v1346, 0.0
        %v1379 = vmin.f32 %v1347, 0.0
        %v1380 = vmin.f32 %v1348, 0.0
        %v1381 = vmin.f32 %v1349, 0.0
        %v1382 = vmin.f32 %v1350, 0.0
        %v1383 = vmin.f32 %v1351, 0.0
        %v1384 = vmin.f32 %v1352, 0.0
        %v1385 = vmin.f32 %v1353, 0.0
        %v1386 = vmin.f32 %v1354, 0.0
        %v1387 = vmin.f32 %v1355, 0.0
        %v1388 = vmin.f32 %v1356, 0.0
        %v1389 = vmin.f32 %v1357, 0.0
        %v1390 = vmin.f32 %v1358, 0.0
        %v1391 = vmin.f32 %v1359, 0.0
        %v1392 = vmin.f32 %v1360, 0.0
        %v1393 = vmin.f32 %v1361, 0.0
        %v1394 = vmin.f32 %v1362, 0.0
        %v1395 = vmin.f32 %v1363, 0.0
        %v1396 = vmin.f32 %v1364, 0.0
        %v1397 = vmin.f32 %v1365, 0.0
        %v1398 = vmin.f32 %v1366, 0.0
        %v1399 = vmin.f32 %v1367, 0.0
        %v1400 = vmin.f32 %v1368, 0.0
        %v1401 = vmin.f32 %v1369, 0.0
        %v1402 = vmin.f32 %v1370, 0.0
        %v1403 = vmin.f32 %v1371, 0.0
        %v1404 = vmin.f32 %v1372, 0.0
        %v1405 = vmin.f32 %v1373, 0.0
        %v1406 = vmin.f32 %v1374, 0.0
        %v1407 = vmin.f32 %v1375, 0.0
        %v1408 = vmin.f32 %v1376, 0.0
        %v1409 = vmul.f32 %v1377, 1.442695
        %v1410 = vpow.pop %v1409
        %v1411 = vmul.f32 %v1378, 1.442695
        %v1412 = vpow.pop %v1411
        %v1413 = vmul.f32 %v1379, 1.442695
        %v1414 = vpow.pop %v1413
        %v1415 = vmul.f32 %v1380, 1.442695
        %v1416 = vpow.pop %v1415
        %v1417 = vmul.f32 %v1381, 1.442695
        %v1418 = vpow.pop %v1417
        %v1419 = vmul.f32 %v1382, 1.442695
        %v1420 = vpow.pop %v1419
        %v1421 = vmul.f32 %v1383, 1.442695
        %v1422 = vpow.pop %v1421
        %v1423 = vmul.f32 %v1384, 1.442695
        %v1424 = vpow.pop %v1423
        %v1425 = vmul.f32 %v1385, 1.442695
        %v1426 = vpow.pop %v1425
        %v1427 = vmul.f32 %v1386, 1.442695
        %v1428 = vpow.pop %v1427
        %v1429 = vmul.f32 %v1387, 1.442695
        %v1430 = vpow.pop %v1429
        %v1431 = vmul.f32 %v1388, 1.442695
        %v1432 = vpow.pop %v1431
        %v1433 = vmul.f32 %v1389, 1.442695
        %v1434 = vpow.pop %v1433
        %v1435 = vmul.f32 %v1390, 1.442695
        %v1436 = vpow.pop %v1435
        %v1437 = vmul.f32 %v1391, 1.442695
        %v1438 = vpow.pop %v1437
        %v1439 = vmul.f32 %v1392, 1.442695
        %v1440 = vpow.pop %v1439
        %v1441 = vmul.f32 %v1393, 1.442695
        %v1442 = vpow.pop %v1441
        %v1443 = vmul.f32 %v1394, 1.442695
        %v1444 = vpow.pop %v1443
        %v1445 = vmul.f32 %v1395, 1.442695
        %v1446 = vpow.pop %v1445
        %v1447 = vmul.f32 %v1396, 1.442695
        %v1448 = vpow.pop %v1447
        %v1449 = vmul.f32 %v1397, 1.442695
        %v1450 = vpow.pop %v1449
        %v1451 = vmul.f32 %v1398, 1.442695
        %v1452 = vpow.pop %v1451
        %v1453 = vmul.f32 %v1399, 1.442695
        %v1454 = vpow.pop %v1453
        %v1455 = vmul.f32 %v1400, 1.442695
        %v1456 = vpow.pop %v1455
        %v1457 = vmul.f32 %v1401, 1.442695
        %v1458 = vpow.pop %v1457
        %v1459 = vmul.f32 %v1402, 1.442695
        %v1460 = vpow.pop %v1459
        %v1461 = vmul.f32 %v1403, 1.442695
        %v1462 = vpow.pop %v1461
        %v1463 = vmul.f32 %v1404, 1.442695
        %v1464 = vpow.pop %v1463
        %v1465 = vmul.f32 %v1405, 1.442695
        %v1466 = vpow.pop %v1465
        %v1467 = vmul.f32 %v1406, 1.442695
        %v1468 = vpow.pop %v1467
        %v1469 = vmul.f32 %v1407, 1.442695
        %v1470 = vpow.pop %v1469
        %v1471 = vmul.f32 %v1408, 1.442695
        %v1472 = vpow.pop %v1471
        %v1473 = vmul.f32 %v1076, %v1410
        %v1474 = vmul.f32 %v1077, %v1412
        %v1475 = vmul.f32 %v1078, %v1414
        %v1476 = vmul.f32 %v1079, %v1416
        %v1477 = vmul.f32 %v1080, %v1418
        %v1478 = vmul.f32 %v1081, %v1420
        %v1479 = vmul.f32 %v1082, %v1422
        %v1480 = vmul.f32 %v1083, %v1424
        %v1481 = vmul.f32 %v1084, %v1426
        %v1482 = vmul.f32 %v1085, %v1428
        %v1483 = vmul.f32 %v1086, %v1430
        %v1484 = vmul.f32 %v1087, %v1432
        %v1485 = vmul.f32 %v1088, %v1434
        %v1486 = vmul.f32 %v1089, %v1436
        %v1487 = vmul.f32 %v1090, %v1438
        %v1488 = vmul.f32 %v1091, %v1440
        %v1489 = vmul.f32 %v1092, %v1442
        %v1490 = vmul.f32 %v1093, %v1444
        %v1491 = vmul.f32 %v1094, %v1446
        %v1492 = vmul.f32 %v1095, %v1448
        %v1493 = vmul.f32 %v1096, %v1450
        %v1494 = vmul.f32 %v1097, %v1452
        %v1495 = vmul.f32 %v1098, %v1454
        %v1496 = vmul.f32 %v1099, %v1456
        %v1497 = vmul.f32 %v1100, %v1458
        %v1498 = vmul.f32 %v1101, %v1460
        %v1499 = vmul.f32 %v1102, %v1462
        %v1500 = vmul.f32 %v1103, %v1464
        %v1501 = vmul.f32 %v1104, %v1466
        %v1502 = vmul.f32 %v1105, %v1468
        %v1503 = vmul.f32 %v1106, %v1470
        %v1504 = vmul.f32 %v1107, %v1472
        %v1505 = vsub.f32 %v1204, %v1242
        %v1506 = vmul.f32 %v1505, 1.442695
        %v1507 = vpow.pop %v1506
        %v1508 = vld [vmem:[#allocation4] sm:$0x1]
        %v1509 = vmul.f32 %v1507, %v1508
        %v1510 = vadd.f32 %v1473, %v1474
        %v1511 = vadd.f32 %v1510, %v1475
        %v1512 = vadd.f32 %v1511, %v1476
        %v1513 = vadd.f32 %v1512, %v1477
        %v1514 = vadd.f32 %v1513, %v1478
        %v1515 = vadd.f32 %v1514, %v1479
        %v1516 = vadd.f32 %v1515, %v1480
        %v1517 = vadd.f32 %v1516, %v1481
        %v1518 = vadd.f32 %v1517, %v1482
        %v1519 = vadd.f32 %v1518, %v1483
        %v1520 = vadd.f32 %v1519, %v1484
        %v1521 = vadd.f32 %v1520, %v1485
        %v1522 = vadd.f32 %v1521, %v1486
        %v1523 = vadd.f32 %v1522, %v1487
        %v1524 = vadd.f32 %v1523, %v1488
        %v1525 = vadd.f32 %v1524, %v1489
        %v1526 = vadd.f32 %v1525, %v1490
        %v1527 = vadd.f32 %v1526, %v1491
        %v1528 = vadd.f32 %v1527, %v1492
        %v1529 = vadd.f32 %v1528, %v1493
        %v1530 = vadd.f32 %v1529, %v1494
        %v1531 = vadd.f32 %v1530, %v1495
        %v1532 = vadd.f32 %v1531, %v1496
        %v1533 = vadd.f32 %v1532, %v1497
        %v1534 = vadd.f32 %v1533, %v1498
        %v1535 = vadd.f32 %v1534, %v1499
        %v1536 = vadd.f32 %v1535, %v1500
        %v1537 = vadd.f32 %v1536, %v1501
        %v1538 = vadd.f32 %v1537, %v1502
        %v1539 = vadd.f32 %v1538, %v1503
        %v1540 = vadd.f32 %v1539, %v1504
        %v1541 = vrot.slane %v1540, 4
        %v1542 = vadd.f32 %v1540, %v1541
        %v1543 = vrot.slane %v1542, 2
        %v1544 = vadd.f32 %v1542, %v1543
        %v1545 = vrot.slane %v1544, 1
        %v1546 = vadd.f32 %v1544, %v1545
        %v1547 = vadd.f32 %v1509, %v1546
        %1548 = vst [vmem:[#allocation4] sm:$0x1] %v1547
        %1549 = vxpose.xlu0.b32.start [1/16] %v715, 128
        %1550 = vxpose.xlu0.b32.cont [2/16] %v716, 128
        %1551 = vxpose.xlu0.b32.cont [3/16] %v717, 128
        %1552 = vxpose.xlu0.b32.cont [4/16] %v718, 128
        %1553 = vxpose.xlu0.b32.cont [5/16] %v719, 128
        %1554 = vxpose.xlu0.b32.cont [6/16] %v720, 128
        %1555 = vxpose.xlu0.b32.cont [7/16] %v721, 128
        %1556 = vxpose.xlu0.b32.cont [8/16] %v722, 128
        %1557 = vxpose.xlu0.b32.cont [9/16] %v723, 128
        %1558 = vxpose.xlu0.b32.cont [10/16] %v724, 128
        %1559 = vxpose.xlu0.b32.cont [11/16] %v725, 128
        %1560 = vxpose.xlu0.b32.cont [12/16] %v726, 128
        %1561 = vxpose.xlu0.b32.cont [13/16] %v727, 128
        %1562 = vxpose.xlu0.b32.cont [14/16] %v728, 128
        %1563 = vxpose.xlu0.b32.cont [15/16] %v729, 128
        %1564 = vxpose.xlu0.b32.end [16/16] %v730, 128
        %v1565 = vpop.trf.xlu0
        %v1566 = vpop.trf.xlu0
        %v1567 = vpop.trf.xlu0
        %v1568 = vpop.trf.xlu0
        %v1569 = vpop.trf.xlu0
        %v1570 = vpop.trf.xlu0
        %v1571 = vpop.trf.xlu0
        %v1572 = vpop.trf.xlu0
        %v1573 = vpop.trf.xlu0
        %v1574 = vpop.trf.xlu0
        %v1575 = vpop.trf.xlu0
        %v1576 = vpop.trf.xlu0
        %v1577 = vpop.trf.xlu0
        %v1578 = vpop.trf.xlu0
        %v1579 = vpop.trf.xlu0
        %v1580 = vpop.trf.xlu0
        %1581 = vxpose.xlu0.b32.start [1/16] %v731, 128
        %1582 = vxpose.xlu0.b32.cont [2/16] %v732, 128
        %1583 = vxpose.xlu0.b32.cont [3/16] %v733, 128
        %1584 = vxpose.xlu0.b32.cont [4/16] %v734, 128
        %1585 = vxpose.xlu0.b32.cont [5/16] %v735, 128
        %1586 = vxpose.xlu0.b32.cont [6/16] %v736, 128
        %1587 = vxpose.xlu0.b32.cont [7/16] %v737, 128
        %1588 = vxpose.xlu0.b32.cont [8/16] %v738, 128
        %1589 = vxpose.xlu0.b32.cont [9/16] %v739, 128
        %1590 = vxpose.xlu0.b32.cont [10/16] %v740, 128
        %1591 = vxpose.xlu0.b32.cont [11/16] %v741, 128
        %1592 = vxpose.xlu0.b32.cont [12/16] %v742, 128
        %1593 = vxpose.xlu0.b32.cont [13/16] %v743, 128
        %1594 = vxpose.xlu0.b32.cont [14/16] %v744, 128
        %1595 = vxpose.xlu0.b32.cont [15/16] %v745, 128
        %1596 = vxpose.xlu0.b32.end [16/16] %v746, 128
        %v1597 = vpop.trf.xlu0
        %v1598 = vpop.trf.xlu0
        %v1599 = vpop.trf.xlu0
        %v1600 = vpop.trf.xlu0
        %v1601 = vpop.trf.xlu0
        %v1602 = vpop.trf.xlu0
        %v1603 = vpop.trf.xlu0
        %v1604 = vpop.trf.xlu0
        %v1605 = vpop.trf.xlu0
        %v1606 = vpop.trf.xlu0
        %v1607 = vpop.trf.xlu0
        %v1608 = vpop.trf.xlu0
        %v1609 = vpop.trf.xlu0
        %v1610 = vpop.trf.xlu0
        %v1611 = vpop.trf.xlu0
        %v1612 = vpop.trf.xlu0
        %1613 = vmatprep.subr.mxu0 0.0
        %1614 = vmatpush1.msra.mxu0 %v1488
        %1615 = vmatprep.subr.mxu0 0.0
        %1616 = vmatpush1.msra.mxu0 %v1487
        %1617 = vmatprep.subr.mxu0 0.0
        %1618 = vmatpush1.msra.mxu0 %v1486
        %1619 = vmatprep.subr.mxu0 0.0
        %1620 = vmatpush1.msra.mxu0 %v1485
        %1621 = vmatprep.subr.mxu0 0.0
        %1622 = vmatpush1.msra.mxu0 %v1484
        %1623 = vmatprep.subr.mxu0 0.0
        %1624 = vmatpush1.msra.mxu0 %v1483
        %1625 = vmatprep.subr.mxu0 0.0
        %1626 = vmatpush1.msra.mxu0 %v1482
        %1627 = vmatprep.subr.mxu0 0.0
        %1628 = vmatpush1.msra.mxu0 %v1481
        %1629 = vmatprep.subr.mxu0 0.0
        %1630 = vmatpush1.msra.mxu0 %v1480
        %1631 = vmatprep.subr.mxu0 0.0
        %1632 = vmatpush1.msra.mxu0 %v1479
        %1633 = vmatprep.subr.mxu0 0.0
        %1634 = vmatpush1.msra.mxu0 %v1478
        %1635 = vmatprep.subr.mxu0 0.0
        %1636 = vmatpush1.msra.mxu0 %v1477
        %1637 = vmatprep.subr.mxu0 0.0
        %1638 = vmatpush1.msra.mxu0 %v1476
        %1639 = vmatprep.subr.mxu0 0.0
        %1640 = vmatpush1.msra.mxu0 %v1475
        %1641 = vmatprep.subr.mxu0 0.0
        %1642 = vmatpush1.msra.mxu0 %v1474
        %1643 = vmatprep.subr.mxu0 0.0
        %1644 = vmatpush1.msra.mxu0 %v1473
        %1645 = vmatprep.subr.mxu0 0.0
        %1646 = vmatpush2.msra.mxu0 %v1504
        %1647 = vmatprep.subr.mxu0 0.0
        %1648 = vmatpush2.msra.mxu0 %v1503
        %1649 = vmatprep.subr.mxu0 0.0
        %1650 = vmatpush2.msra.mxu0 %v1502
        %1651 = vmatprep.subr.mxu0 0.0
        %1652 = vmatpush2.msra.mxu0 %v1501
        %1653 = vmatprep.subr.mxu0 0.0
        %1654 = vmatpush2.msra.mxu0 %v1500
        %1655 = vmatprep.subr.mxu0 0.0
        %1656 = vmatpush2.msra.mxu0 %v1499
        %1657 = vmatprep.subr.mxu0 0.0
        %1658 = vmatpush2.msra.mxu0 %v1498
        %1659 = vmatprep.subr.mxu0 0.0
        %1660 = vmatpush2.msra.mxu0 %v1497
        %1661 = vmatprep.subr.mxu0 0.0
        %1662 = vmatpush2.msra.mxu0 %v1496
        %1663 = vmatprep.subr.mxu0 0.0
        %1664 = vmatpush2.msra.mxu0 %v1495
        %1665 = vmatprep.subr.mxu0 0.0
        %1666 = vmatpush2.msra.mxu0 %v1494
        %1667 = vmatprep.subr.mxu0 0.0
        %1668 = vmatpush2.msra.mxu0 %v1493
        %1669 = vmatprep.subr.mxu0 0.0
        %1670 = vmatpush2.msra.mxu0 %v1492
        %1671 = vmatprep.subr.mxu0 0.0
        %1672 = vmatpush2.msra.mxu0 %v1491
        %1673 = vmatprep.subr.mxu0 0.0
        %1674 = vmatpush2.msra.mxu0 %v1490
        %1675 = vmatprep.subr.mxu0 0.0
        %1676 = vmatpush2.msra.mxu0 %v1489
        %1677 = vmatprep.mubr.f32.mxu0 %v1597
        %1678 = vmatmul.mubr.f32.gmra.mxu0 %v1565
        %v1679 = vpop.f32.mrf.mxu0
        %v1680 = vadd.f32 0.0, %v1679
        %v1681 = vpop.f32.mrf.mxu0
        %1682 = vmatprep.mubr.f32.mxu0 %v1598
        %1683 = vmatmul.mubr.f32.gmra.mxu0 %v1566
        %v1684 = vpop.f32.mrf.mxu0
        %v1685 = vadd.f32 0.0, %v1684
        %v1686 = vpop.f32.mrf.mxu0
        %1687 = vmatprep.mubr.f32.mxu0 %v1599
        %1688 = vmatmul.mubr.f32.gmra.mxu0 %v1567
        %v1689 = vpop.f32.mrf.mxu0
        %v1690 = vadd.f32 0.0, %v1689
        %v1691 = vpop.f32.mrf.mxu0
        %1692 = vmatprep.mubr.f32.mxu0 %v1600
        %1693 = vmatmul.mubr.f32.gmra.mxu0 %v1568
        %v1694 = vpop.f32.mrf.mxu0
        %v1695 = vadd.f32 0.0, %v1694
        %v1696 = vpop.f32.mrf.mxu0
        %1697 = vdwg.mxu0
        %v1698 = vld [vmem:[#allocation2] sm:$0xff]
        %v1699 = vld [vmem:[#allocation2 + $0x8] sm:$0xff]
        %v1700 = vld [vmem:[#allocation2 + $0x10] sm:$0xff]
        %v1701 = vld [vmem:[#allocation2 + $0x18] sm:$0xff]
        %v1703 = vlaneseq
        %v1704 = vshrl.u32 %v1703, 7
        %v1705 = vsub.s32 0, %v1704
        %v1706 = vrot.slane %v1507, %v1705
        %v1708 = vmul.f32 %v1706, %v1698
        %v1709 = vmul.f32 %v1706, %v1699
        %v1710 = vmul.f32 %v1706, %v1700
        %v1711 = vmul.f32 %v1706, %v1701
        %v1712 = vadd.f32 %v1708, %v1680
        %v1713 = vadd.f32 %v1709, %v1685
        %v1714 = vadd.f32 %v1710, %v1690
        %v1715 = vadd.f32 %v1711, %v1695
        %1716 = vst [vmem:[#allocation2] sm:$0xff] %v1712
        %1717 = vst [vmem:[#allocation2 + $0x8] sm:$0xff] %v1713
        %1718 = vst [vmem:[#allocation2 + $0x10] sm:$0xff] %v1714
        %1719 = vst [vmem:[#allocation2 + $0x18] sm:$0xff] %v1715
        %1720 = vst [vmem:[#allocation3] sm:$0x1] %v1242
        // Predicated region
        $region45: #{tpu_custom_call.1} parent=39 // pred_check
          %p1721 = pneg %p344
        $region46: #{tpu_custom_call.1} parent=39 // pred_check_branch
          %1723 = sbr.rel (%p1721) target = $region48
        $region47: #{tpu_custom_call.1} parent=39 // pred_region
          %v1724 = vld [vmem:[#allocation2] sm:$0xff]
          %v1725 = vld [vmem:[#allocation2 + $0x8] sm:$0xff]
          %v1726 = vld [vmem:[#allocation2 + $0x10] sm:$0xff]
          %v1727 = vld [vmem:[#allocation2 + $0x18] sm:$0xff]
          %1728 = vst [vmem:[%s314] sm:$0xff] %v1724
          %1729 = vst [vmem:[%s314 + $0x8] sm:$0xff] %v1725
          %1730 = vst [vmem:[%s314 + $0x10] sm:$0xff] %v1726
          %1731 = vst [vmem:[%s314 + $0x18] sm:$0xff] %v1727
          %v1732 = vld [vmem:[#allocation3] sm:$0x1]
          %1733 = vst [vmem:[%s320] sm:$0x1] %v1732
          %v1734 = vld [vmem:[#allocation4] sm:$0x1]
          %1735 = vst [vmem:[%s326] sm:$0x1] %v1734
        $region48: #{tpu_custom_call.1} parent=39 // pred_fallthru
          _
        %s1736 = sand.u32 %s164, 1
        %s1737 = scalar_lea.sflag [#allocation6], %s1736
        %s1738 = sand.u32 %s164, 1
        %s1739 = smul.addr %s1738, 32
        %s1740 = scalar_lea.vmem [#allocation5], %s1739
        %s1741 = sand.u32 %s25, 1
        %s1742 = scalar_lea.sflag [#allocation8], %s1741
        %s1743 = sand.u32 %s190, 1
        %s1744 = scalar_lea.vmem [#allocation7], %s1743
        %s1745 = sand.u32 %s25, 1
        %s1746 = scalar_lea.sflag [#allocation8], %s1745
        %s1747 = sand.u32 %s216, 1
        %s1748 = scalar_lea.vmem [#allocation9], %s1747
        // Predicated region
        $region49: #{tpu_custom_call.1} parent=39 // pred_check
          %p1749 = pneg %p174
        $region50: #{tpu_custom_call.1} parent=39 // pred_check_branch
          %1751 = sbr.rel (%p1749) target = $region52
        $region51: #{tpu_custom_call.1} parent=39 // pred_region
          %s1753 = ssub.s32 512, 512
          %1754 = vsyncadd %s1737, %s1753
          %s1755 = smul.addr %s29, 4
          %s1756 = smul.addr %s1755, 128
          %s1757 = scalar_lea.hbm %s5, %s1756
          %s1758 = sshll.u32 %s1740, 4
          %s1759 = int_to_ptr.vmem [resolvable:$true] %s1758
          %1764 = dma.vmem_to_hbm [thread:$0]  %s1759, 512, %s1757, %s1737, 128, 128, 8
        $region52: #{tpu_custom_call.1} parent=39 // pred_fallthru
          _
        // Predicated region
        $region53: #{tpu_custom_call.1} parent=39 // pred_check
          %p1765 = pneg %p200
        $region54: #{tpu_custom_call.1} parent=39 // pred_check_branch
          %1767 = sbr.rel (%p1765) target = $region56
        $region55: #{tpu_custom_call.1} parent=39 // pred_region
          %s1769 = ssub.s32 16, 16
          %1770 = vsyncadd %s1742, %s1769
          %s1771 = smul.addr %s29, 16
          %s1772 = scalar_lea.hbm %s6, %s1771
          %s1774 = sshll.u32 %s1744, 4
          %s1775 = int_to_ptr.vmem [resolvable:$true] %s1774
          %1777 = dma.vmem_to_hbm [thread:$0]  %s1775, 16, %s1772, %s1742
        $region56: #{tpu_custom_call.1} parent=39 // pred_fallthru
          _
        // Predicated region
        $region57: #{tpu_custom_call.1} parent=39 // pred_check
          %p1778 = pneg %p226
        $region58: #{tpu_custom_call.1} parent=39 // pred_check_branch
          %1780 = sbr.rel (%p1778) target = $region60
        $region59: #{tpu_custom_call.1} parent=39 // pred_region
          %s1782 = ssub.s32 16, 16
          %1783 = vsyncadd %s1746, %s1782
          %s1784 = smul.addr %s29, 16
          %s1785 = scalar_lea.hbm %s7, %s1784
          %s1787 = sshll.u32 %s1748, 4
          %s1788 = int_to_ptr.vmem [resolvable:$true] %s1787
          %1790 = dma.vmem_to_hbm [thread:$0]  %s1788, 16, %s1785, %s1746
        $region60: #{tpu_custom_call.1} parent=39 // pred_fallthru
          _
      $region40: #{tpu_custom_call.1} parent=5 // pred_fallthru
        _
      %p1791 = scmp.le.s32.totalorder 2, %s20
      // Predicated region
      $region61: #{tpu_custom_call.1} parent=5 // pred_check
        %p1792 = pneg %p1791
      $region62: #{tpu_custom_call.1} parent=5 // pred_check_branch
        %1794 = sbr.rel (%p1792) target = $region64
      $region63: #{tpu_custom_call.1} parent=5 // pred_region
        %s1795 = ssub.s32 %s20, 2
        // Predicated region
        $region65: #{tpu_custom_call.1} parent=63 // pred_check
          %p1796 = pneg %p180
        $region66: #{tpu_custom_call.1} parent=63 // pred_check_branch
          %1798 = sbr.rel (%p1796) target = $region68
        $region67: #{tpu_custom_call.1} parent=63 // pred_region
          %s1799 = sand.u32 %s165, 1
          %s1800 = scalar_lea.sflag [#allocation6], %s1799
          %s1801 = sand.u32 %s165, 1
          %s1802 = smul.addr %s1801, 32
          %s1803 = scalar_lea.vmem [#allocation5], %s1802
          %1804 = dma.done %s1800, 512
        $region68: #{tpu_custom_call.1} parent=63 // pred_fallthru
          _
        // Predicated region
        $region69: #{tpu_custom_call.1} parent=63 // pred_check
          %p1805 = pneg %p206
        $region70: #{tpu_custom_call.1} parent=63 // pred_check_branch
          %1807 = sbr.rel (%p1805) target = $region72
        $region71: #{tpu_custom_call.1} parent=63 // pred_region
          %s1808 = sand.u32 %s26, 1
          %s1809 = scalar_lea.sflag [#allocation8], %s1808
          %s1810 = sand.u32 %s191, 1
          %s1811 = scalar_lea.vmem [#allocation7], %s1810
          %1812 = dma.done %s1809, 16
        $region72: #{tpu_custom_call.1} parent=63 // pred_fallthru
          _
        // Predicated region
        $region73: #{tpu_custom_call.1} parent=63 // pred_check
          %p1813 = pneg %p232
        $region74: #{tpu_custom_call.1} parent=63 // pred_check_branch
          %1815 = sbr.rel (%p1813) target = $region76
        $region75: #{tpu_custom_call.1} parent=63 // pred_region
          %s1816 = sand.u32 %s26, 1
          %s1817 = scalar_lea.sflag [#allocation8], %s1816
          %s1818 = sand.u32 %s217, 1
          %s1819 = scalar_lea.vmem [#allocation9], %s1818
          %1820 = dma.done %s1817, 16
        $region76: #{tpu_custom_call.1} parent=63 // pred_fallthru
          _
      $region64: #{tpu_custom_call.1} parent=5 // pred_fallthru
        _
    $region6: #{tpu_custom_call.1} parent=1 // loop_footer
      %s24 = sadd.s32 1, %s20
    $region7: #{tpu_custom_call.1} parent=1 // loop_footer_branch
      %19 = sbr.rel target = $region3
    $region8: #{tpu_custom_call.1} parent=1 // loop_exit
      _
    %1821 = vsyncpa [#allocation6], 1
    %s1822 = scalar_lea.sflag [#allocation6], 1
    %1823 = vsyncpa %s1822, 1
    %1824 = vsyncpa [#allocation8], 1
    %s1825 = scalar_lea.sflag [#allocation8], 1
    %1826 = vsyncpa %s1825, 1

</llo_original>
